<compile_context>
chip_gen: v5e
topology: v5e:2x2
jax: 0.10.0
libtpu: 0.0.40
codegen_flags: <defaults>
</compile_context>

<pallas_src>
import jax
import jax.numpy as jnp
import numpy as np
from jax.experimental import pallas as pl
from jax.experimental.pallas import tpu as pltpu

# ----------------------------- configuration -------------------------------
B = 16           # total batch (commits)
B_BLK = 8        # commits per grid step (8 -> unmasked (8,128) stores)
DIM = 32         # embedding_dim (synthetic "roberta" hidden size)
NUM_FILE = 4     # number of code files per commit
SEQ = 8          # token sequence length
V_ENC = 128      # synthetic encoder vocab (== lane / MXU width)
CO = 8           # num_filters
KS = (1, 2, 3)   # filter_sizes (ascending; len must be 3 so fc1 in = 2*len*Co)
HIDDEN = 16      # hidden_units
CLASS = 1        # class_num

assert B % B_BLK == 0
assert tuple(sorted(KS)) == KS and len(KS) == 3
N_TAP = max(KS)                          # 3 tap matrices
N_SENT_BLK = (1 + NUM_FILE) * B_BLK      # 40 sequences per grid step
FC1_IN = 2 * len(KS) * CO                # 48
LANES = 128
OUT_PAD = 128                            # lane-dense padded output width

# ---- packed weight-slab row layout (single f32 (SLAB_ROWS, 128) buffer) ----
R_ENC = 0                                # (V_ENC, DIM) embedding table
R_POOLW = R_ENC + V_ENC                  # 128: (DIM, DIM) pooler dense
R_FC3 = R_POOLW + DIM                    # 160: (DIM, 3*CO) fc3^T
R_TAP = R_FC3 + DIM                      # 192: 3 x (DIM, 3*CO) lane-aligned taps
R_FC1 = R_TAP + N_TAP * DIM              # 288: (48, 16) fc1^T
R_BIAS = R_FC1 + FC1_IN                  # 336: bias/aux rows
SLAB_ROWS = R_BIAS + 8                   # 344 (multiple of 8)
# bias rows: 0 pool_b | 1 fc3_b | 2 conv_b (concat, 24) | 3 fc1_b | 4 fc2_b | 5 fc2_w


# ------------------------------ fused Pallas kernel -------------------------
def fused_forward_kernel(msg_ids_ref, msg_mask_ref, code_ids_ref, code_mask_ref,
                         w_ref, out_ref):
    """Per grid step: one block of B_BLK commits.

    msg_ids/mask : (B_BLK, SEQ) i32
    code_ids/mask: (B_BLK, NUM_FILE, SEQ) i32
    w            : (SLAB_ROWS, 128) f32 (VMEM-resident, constant index_map)
    out          : (B_BLK, 128) f32 (lane-dense; wrapper reads column 0)
    """
    # ---- static views into the packed weight slab ----
    enc_bf = w_ref[R_ENC:R_ENC + V_ENC, 0:DIM].astype(jnp.bfloat16)     # (128,32)
    pool_w = w_ref[R_POOLW:R_POOLW + DIM, 0:DIM]                        # (32,32)
    fc3_wt = w_ref[R_FC3:R_FC3 + DIM, 0:3 * CO]                         # (32,24)
    w_tap = [w_ref[R_TAP + j * DIM:R_TAP + (j + 1) * DIM, 0:3 * CO]
             for j in range(N_TAP)]                                     # 3 x (32,24)
    fc1_msg = w_ref[R_FC1:R_FC1 + 3 * CO, 0:HIDDEN]                     # (24,16)
    fc1_code = w_ref[R_FC1 + 3 * CO:R_FC1 + FC1_IN, 0:HIDDEN]           # (24,16)
    biases = w_ref[R_BIAS:R_BIAS + 8, :]                                # one load
    pool_b = biases[0:1, 0:DIM]
    fc3_b = biases[1:2, 0:3 * CO]
    conv_b = biases[2:3, 0:3 * CO]
    fc1_b = biases[3:4, 0:HIDDEN]
    fc2_b = biases[4:5, 0:CLASS]
    fc2_row = biases[5:6, 0:HIDDEN]

    # ---- assemble per-block token ids/masks: msg rows, then file-major code ----
    code_ids = code_ids_ref[...]                                        # (B_BLK,4,8)
    code_mask = code_mask_ref[...]
    ids_all = jnp.concatenate(
        [msg_ids_ref[...]] + [code_ids[:, f, :] for f in range(NUM_FILE)], axis=0)
    mask_all = jnp.concatenate(
        [msg_mask_ref[...]] + [code_mask[:, f, :] for f in range(NUM_FILE)],
        axis=0).astype(jnp.float32)                                     # (40, 8)

    # ---- pooling: mask-weighted vocab histogram (VPU) + ONE MXU dot vs enc ----
    # counts[s, v] = sum_t mask[s,t] * [ids[s,t] == v]  (exact in bf16)
    # NOTE: ids >= V_ENC would silently contribute zero (reference gather clamps);
    # not triggered by in-range data.
    vocab_iota = jax.lax.broadcasted_iota(jnp.int32, (N_SENT_BLK, V_ENC), 1)
    counts = jnp.zeros((N_SENT_BLK, V_ENC), jnp.float32)
    for j in range(SEQ):  # 8 static iterations of tiny VPU ops
        counts = counts + jnp.where(vocab_iota == ids_all[:, j:j + 1],
                                    mask_all[:, j:j + 1], 0.0)
    denom = jnp.sum(mask_all, axis=1, keepdims=True)                    # (40, 1)
    sums = jnp.dot(counts.astype(jnp.bfloat16), enc_bf,
                   preferred_element_type=jnp.float32)                  # (40, 32)
    mean = sums * pl.reciprocal(jnp.maximum(denom, 1.0), approx=True)   # EUP recip
    pooled = jnp.tanh(
        jnp.dot(mean, pool_w, preferred_element_type=jnp.float32) + pool_b)

    pooled_msg = pooled[0:B_BLK]                                        # (8, 32)
    pooled_code = pooled[B_BLK:]                                        # (32, 32)

    # ---- fc3(msg) ----
    x_msg = jnp.dot(pooled_msg, fc3_wt,
                    preferred_element_type=jnp.float32) + fc3_b         # (8, 24)

    # ---- conv -> ReLU -> max-pool, with lane-aligned tap matmuls -------------
    # z_tap[j][:, k*CO:(k+1)*CO] = pooled_code @ conv_w[k][:, j, :]^T (0 if j>=K_k)
    z_tap = [jnp.dot(pooled_code, w_tap[j], preferred_element_type=jnp.float32)
             for j in range(N_TAP)]                                     # 3 x (32,24)

    def zt(j, f):  # file f's rows of tap j (sublane-aligned static slice)
        return z_tap[j][f * B_BLK:(f + 1) * B_BLK]

    NEG = jnp.float32(-1e30)
    lane = jax.lax.broadcasted_iota(jnp.int32, (B_BLK, 3 * CO), 1)
    m = None
    for t in range(NUM_FILE - min(KS) + 1):
        acc = None
        for j in range(N_TAP):
            if t + j < NUM_FILE:
                term = zt(j, t + j)
                acc = term if acc is None else acc + term
        # lanes of filters whose window would run past the last file -> -inf
        n_valid = sum(1 for K in KS if t + K <= NUM_FILE) * CO
        if n_valid < len(KS) * CO:
            acc = jnp.where(lane < n_valid, acc, NEG)
        m = acc if m is None else jnp.maximum(m, acc)
    # bias/ReLU hoisted after the max (monotone, bit-exact)
    x_code = jnp.maximum(m + conv_b, 0.0)                               # (8, 24)

    # ---- fc1 (row-slice split, no lane concat) -> fc2 -> sigmoid -------------
    # dropout is identity in eval mode
    h = jnp.maximum(
        jnp.dot(x_msg, fc1_msg, preferred_element_type=jnp.float32)
        + jnp.dot(x_code, fc1_code, preferred_element_type=jnp.float32)
        + fc1_b, 0.0)                                                   # (8, 16)
    logits = jnp.sum(h * fc2_row, axis=1, keepdims=True) + fc2_b        # (8, 1)
    out_ref[...] = jnp.broadcast_to(jax.nn.sigmoid(logits), (B_BLK, OUT_PAD))


# ------------------------------ host-side packing ---------------------------
def build_weight_slab(p):
    slab = np.zeros((SLAB_ROWS, LANES), np.float32)
    slab[R_ENC:R_ENC + V_ENC, 0:DIM] = np.asarray(p["enc_embed"])
    slab[R_POOLW:R_POOLW + DIM, 0:DIM] = np.asarray(p["pool_w"])
    slab[R_FC3:R_FC3 + DIM, 0:3 * CO] = np.asarray(p["fc3_w"]).T

    # lane-aligned conv tap matrices (zero-padded where a filter has < j+1 taps)
    for j in range(N_TAP):
        wt = np.zeros((DIM, 3 * CO), np.float32)
        for k, K in enumerate(KS):
            if j < K:
                wt[:, k * CO:(k + 1) * CO] = np.asarray(p["conv_w"][k])[:, j, :].T
        slab[R_TAP + j * DIM:R_TAP + (j + 1) * DIM, 0:3 * CO] = wt

    slab[R_FC1:R_FC1 + FC1_IN, 0:HIDDEN] = np.asarray(p["fc1_w"]).T

    slab[R_BIAS + 0, 0:DIM] = np.asarray(p["pool_b"]).reshape(-1)
    slab[R_BIAS + 1, 0:3 * CO] = np.asarray(p["fc3_b"]).reshape(-1)
    slab[R_BIAS + 2, 0:3 * CO] = np.concatenate(
        [np.asarray(p["conv_b"][k]).reshape(-1) for k in range(len(KS))])
    slab[R_BIAS + 3, 0:HIDDEN] = np.asarray(p["fc1_b"]).reshape(-1)
    slab[R_BIAS + 4, 0:CLASS] = np.asarray(p["fc2_b"]).reshape(-1)
    slab[R_BIAS + 5, 0:HIDDEN] = np.asarray(p["fc2_w"]).reshape(-1)
    return jnp.asarray(slab)


# ------------------------------ wrapper --------------------------------------
@jax.jit
def codebert4jit_forward(msg_input_ids, msg_input_mask, msg_segment_ids,
                         code_input_ids, code_input_mask, code_segment_ids,
                         weight_slab):
    """code_type == 'CNN', msg_type == 'None' branch. segment ids unused.

    Zero wrapper glue: inputs go to the kernel in their natural layouts; the
    file-major permutation and int->float mask cast happen in-kernel.
    """
    del msg_segment_ids, code_segment_ids
    out = pl.pallas_call(
        fused_forward_kernel,
        out_shape=jax.ShapeDtypeStruct((B, OUT_PAD), jnp.float32),
        grid=(B // B_BLK,),
        in_specs=[
            pl.BlockSpec((B_BLK, SEQ), lambda i: (i, 0)),
            pl.BlockSpec((B_BLK, SEQ), lambda i: (i, 0)),
            pl.BlockSpec((B_BLK, NUM_FILE, SEQ), lambda i: (i, 0, 0)),
            pl.BlockSpec((B_BLK, NUM_FILE, SEQ), lambda i: (i, 0, 0)),
            # constant index_map -> weight slab stays VMEM-resident across steps
            pl.BlockSpec((SLAB_ROWS, LANES), lambda i: (0, 0)),
        ],
        out_specs=pl.BlockSpec((B_BLK, OUT_PAD), lambda i: (i, 0)),
        compiler_params=pltpu.CompilerParams(
            dimension_semantics=("parallel",)),   # shard across TCs on v7x
    )(msg_input_ids, msg_input_mask, code_input_ids, code_input_mask, weight_slab)
    return out[:, 0]                              # (B,) sigmoid probs


# ------------------------------ reference (plain JAX) ------------------------
def reference_forward(msg_ids, msg_mask, code_ids, code_mask, params):
    enc = params["enc_embed"]

    def pool(ids, mask):
        emb = enc[ids]
        m = mask.astype(jnp.float32)
        mean = (emb * m[..., None]).sum(1) / jnp.maximum(m.sum(1, keepdims=True), 1.0)
        return jnp.tanh(mean @ params["pool_w"] + params["pool_b"])

    msg_pooled = pool(msg_ids, msg_mask)
    code_pooled = pool(code_ids.reshape(B * NUM_FILE, SEQ),
                       code_mask.reshape(B * NUM_FILE, SEQ)).reshape(B, NUM_FILE, DIM)

    x_msg = msg_pooled @ params["fc3_w"].T + params["fc3_b"]
    feats = []
    for kk, K in enumerate(KS):
        w, b = params["conv_w"][kk], params["conv_b"][kk]
        ys = []
        for t in range(NUM_FILE - K + 1):
            acc = b
            for j in range(K):
                acc = acc + code_pooled[:, t + j, :] @ w[:, j, :].T
            ys.append(jnp.maximum(acc, 0.0))
        feats.append(jnp.max(jnp.stack(ys, 0), 0))
    x_code = jnp.concatenate(feats, 1)
    x_commit = jnp.concatenate([x_msg, x_code], 1)
    h = jnp.maximum(x_commit @ params["fc1_w"].T + params["fc1_b"], 0.0)
    logits = h @ params["fc2_w"].T + params["fc2_b"]
    return jax.nn.sigmoid(logits).squeeze(1)


# ------------------------------ main ------------------------------------------
if __name__ == "__main__":
    key = jax.random.PRNGKey(0)
    ks = jax.random.split(key, 16)

    def nrm(k, shape, scale=0.05):
        return (scale * jax.random.normal(k, shape)).astype(jnp.float32)

    params = {
        # synthetic sentence encoder (stands in for roberta-base)
        "enc_embed": nrm(ks[0], (V_ENC, DIM), 0.1),
        "pool_w": nrm(ks[1], (DIM, DIM)),
        "pool_b": nrm(ks[2], (1, DIM)),
        # convs_code_line: Conv2d(1, Co, (K, Dim)) -> weight (Co, K, Dim)
        "conv_w": [nrm(ks[3 + i], (CO, K, DIM)) for i, K in enumerate(KS)],
        "conv_b": [nrm(ks[6 + i], (1, CO)) for i in range(len(KS))],
        # fc3: Linear(Dim, Co*3)
        "fc3_w": nrm(ks[9], (3 * CO, DIM)),
        "fc3_b": nrm(ks[10], (1, 3 * CO)),
        # fc1: Linear(2*len(Ks)*Co, hidden_units)
        "fc1_w": nrm(ks[11], (HIDDEN, FC1_IN)),
        "fc1_b": nrm(ks[12], (1, HIDDEN)),
        # fc2: Linear(hidden_units, class_num)
        "fc2_w": nrm(ks[13], (CLASS, HIDDEN)),
        "fc2_b": nrm(ks[14], (1, CLASS)),
    }
    weight_slab = build_weight_slab(params)

    dk = jax.random.split(ks[15], 5)
    msg_input_ids = jax.random.randint(dk[0], (B, SEQ), 0, V_ENC, dtype=jnp.int32)
    code_input_ids = jax.random.randint(dk[1], (B, NUM_FILE, SEQ), 0, V_ENC,
                                        dtype=jnp.int32)
    msg_input_mask = (jax.random.uniform(dk[2], (B, SEQ)) > 0.2).astype(jnp.int32)
    msg_input_mask = msg_input_mask.at[:, 0].set(1)
    code_input_mask = (jax.random.uniform(dk[3], (B, NUM_FILE, SEQ)) > 0.2
                       ).astype(jnp.int32)
    code_input_mask = code_input_mask.at[:, :, 0].set(1)
    msg_segment_ids = jnp.zeros((B, SEQ), jnp.int32)
    code_segment_ids = jnp.zeros((B, NUM_FILE, SEQ), jnp.int32)

    out = codebert4jit_forward(msg_input_ids, msg_input_mask, msg_segment_ids,
                               code_input_ids, code_input_mask, code_segment_ids,
                               weight_slab)
    out = jax.block_until_ready(out)

    ref = reference_forward(msg_input_ids, msg_input_mask,
                            code_input_ids, code_input_mask, params)
    # tolerance covers MXU bf16-pass rounding, explicit bf16 embedding operand,
    # and the approx EUP reciprocal (~2^-12 rel) in the mean pool.
    np.testing.assert_allclose(np.asarray(out), np.asarray(ref),
                               rtol=3e-3, atol=3e-3)
    assert out.shape == (B,)
    print("KERNEL_OK")
</pallas_src>

<mosaic_0001>
module attributes {stable_mosaic.version = 11 : i64} {
  func.func @fused_forward_kernel(%arg0: i32, %arg1: memref<8x8xi32, #tpu.memory_space<vmem>>, %arg2: memref<8x8xi32, #tpu.memory_space<vmem>>, %arg3: memref<8x4x8xi32, #tpu.memory_space<vmem>>, %arg4: memref<8x4x8xi32, #tpu.memory_space<vmem>>, %arg5: memref<344x128xf32, #tpu.memory_space<vmem>>, %arg6: memref<8x128xf32, #tpu.memory_space<vmem>>) attributes {dimension_semantics = [#tpu.dimension_semantics<parallel>], iteration_bounds = array<i64: 2>, scalar_prefetch = 0 : i64, scratch_operands = 0 : i64, tpu.core_type = #tpu.core_type<tc>, window_params = [{transform_indices = @transform_0, window_bounds = array<i64: 8, 8>}, {transform_indices = @transform_1, window_bounds = array<i64: 8, 8>}, {transform_indices = @transform_2, window_bounds = array<i64: 8, 4, 8>}, {transform_indices = @transform_3, window_bounds = array<i64: 8, 4, 8>}, {pipeline_mode = #tpu.pipeline_mode<synchronous>, transform_indices = @transform_4, window_bounds = array<i64: 344, 128>}, {transform_indices = @transform_5, window_bounds = array<i64: 8, 128>}]} {
    %c0 = arith.constant 0 : index
    %c0_0 = arith.constant 0 : index
    %0 = vector.load %arg5[%c0, %c0_0] : memref<344x128xf32, #tpu.memory_space<vmem>>, vector<128x32xf32>
    %1 = arith.truncf %0 : vector<128x32xf32> to vector<128x32xbf16>
    %c128 = arith.constant 128 : index
    %c0_1 = arith.constant 0 : index
    %2 = vector.load %arg5[%c128, %c0_1] : memref<344x128xf32, #tpu.memory_space<vmem>>, vector<32x32xf32>
    %c160 = arith.constant 160 : index
    %c0_2 = arith.constant 0 : index
    %3 = vector.load %arg5[%c160, %c0_2] : memref<344x128xf32, #tpu.memory_space<vmem>>, vector<32x24xf32>
    %c192 = arith.constant 192 : index
    %c0_3 = arith.constant 0 : index
    %4 = vector.load %arg5[%c192, %c0_3] : memref<344x128xf32, #tpu.memory_space<vmem>>, vector<32x24xf32>
    %c224 = arith.constant 224 : index
    %c0_4 = arith.constant 0 : index
    %5 = vector.load %arg5[%c224, %c0_4] : memref<344x128xf32, #tpu.memory_space<vmem>>, vector<32x24xf32>
    %c256 = arith.constant 256 : index
    %c0_5 = arith.constant 0 : index
    %6 = vector.load %arg5[%c256, %c0_5] : memref<344x128xf32, #tpu.memory_space<vmem>>, vector<32x24xf32>
    %c288 = arith.constant 288 : index
    %c0_6 = arith.constant 0 : index
    %7 = vector.load %arg5[%c288, %c0_6] : memref<344x128xf32, #tpu.memory_space<vmem>>, vector<24x16xf32>
    %c312 = arith.constant 312 : index
    %c0_7 = arith.constant 0 : index
    %8 = vector.load %arg5[%c312, %c0_7] : memref<344x128xf32, #tpu.memory_space<vmem>>, vector<24x16xf32>
    %c336 = arith.constant 336 : index
    %c0_8 = arith.constant 0 : index
    %9 = vector.load %arg5[%c336, %c0_8] : memref<344x128xf32, #tpu.memory_space<vmem>>, vector<8x128xf32>
    %10 = vector.extract_strided_slice %9 {offsets = [0, 0], sizes = [1, 32], strides = [1, 1]} : vector<8x128xf32> to vector<1x32xf32>
    %11 = vector.extract_strided_slice %9 {offsets = [1, 0], sizes = [1, 24], strides = [1, 1]} : vector<8x128xf32> to vector<1x24xf32>
    %12 = vector.extract_strided_slice %9 {offsets = [2, 0], sizes = [1, 24], strides = [1, 1]} : vector<8x128xf32> to vector<1x24xf32>
    %13 = vector.extract_strided_slice %9 {offsets = [3, 0], sizes = [1, 16], strides = [1, 1]} : vector<8x128xf32> to vector<1x16xf32>
    %14 = vector.extract_strided_slice %9 {offsets = [4, 0], sizes = [1, 1], strides = [1, 1]} : vector<8x128xf32> to vector<1x1xf32>
    %15 = vector.extract_strided_slice %9 {offsets = [5, 0], sizes = [1, 16], strides = [1, 1]} : vector<8x128xf32> to vector<1x16xf32>
    %c0_9 = arith.constant 0 : index
    %c0_10 = arith.constant 0 : index
    %c0_11 = arith.constant 0 : index
    %16 = vector.load %arg3[%c0_9, %c0_10, %c0_11] : memref<8x4x8xi32, #tpu.memory_space<vmem>>, vector<8x4x8xi32>
    %c0_12 = arith.constant 0 : index
    %c0_13 = arith.constant 0 : index
    %c0_14 = arith.constant 0 : index
    %17 = vector.load %arg4[%c0_12, %c0_13, %c0_14] : memref<8x4x8xi32, #tpu.memory_space<vmem>>, vector<8x4x8xi32>
    %c0_15 = arith.constant 0 : index
    %c0_16 = arith.constant 0 : index
    %18 = vector.load %arg1[%c0_15, %c0_16] : memref<8x8xi32, #tpu.memory_space<vmem>>, vector<8x8xi32>
    %19 = vector.extract_strided_slice %16 {offsets = [0, 0, 0], sizes = [8, 1, 8], strides = [1, 1, 1]} : vector<8x4x8xi32> to vector<8x1x8xi32>
    %20 = vector.shape_cast %19 : vector<8x1x8xi32> to vector<8x8xi32>
    %21 = vector.extract_strided_slice %16 {offsets = [0, 1, 0], sizes = [8, 1, 8], strides = [1, 1, 1]} : vector<8x4x8xi32> to vector<8x1x8xi32>
    %22 = vector.shape_cast %21 : vector<8x1x8xi32> to vector<8x8xi32>
    %23 = vector.extract_strided_slice %16 {offsets = [0, 2, 0], sizes = [8, 1, 8], strides = [1, 1, 1]} : vector<8x4x8xi32> to vector<8x1x8xi32>
    %24 = vector.shape_cast %23 : vector<8x1x8xi32> to vector<8x8xi32>
    %25 = vector.extract_strided_slice %16 {offsets = [0, 3, 0], sizes = [8, 1, 8], strides = [1, 1, 1]} : vector<8x4x8xi32> to vector<8x1x8xi32>
    %26 = vector.shape_cast %25 : vector<8x1x8xi32> to vector<8x8xi32>
    %27 = tpu.concatenate %18, %20, %22, %24, %26 in 0 : vector<8x8xi32>, vector<8x8xi32>, vector<8x8xi32>, vector<8x8xi32>, vector<8x8xi32> -> vector<40x8xi32>
    %c0_17 = arith.constant 0 : index
    %c0_18 = arith.constant 0 : index
    %28 = vector.load %arg2[%c0_17, %c0_18] : memref<8x8xi32, #tpu.memory_space<vmem>>, vector<8x8xi32>
    %29 = vector.extract_strided_slice %17 {offsets = [0, 0, 0], sizes = [8, 1, 8], strides = [1, 1, 1]} : vector<8x4x8xi32> to vector<8x1x8xi32>
    %30 = vector.shape_cast %29 : vector<8x1x8xi32> to vector<8x8xi32>
    %31 = vector.extract_strided_slice %17 {offsets = [0, 1, 0], sizes = [8, 1, 8], strides = [1, 1, 1]} : vector<8x4x8xi32> to vector<8x1x8xi32>
    %32 = vector.shape_cast %31 : vector<8x1x8xi32> to vector<8x8xi32>
    %33 = vector.extract_strided_slice %17 {offsets = [0, 2, 0], sizes = [8, 1, 8], strides = [1, 1, 1]} : vector<8x4x8xi32> to vector<8x1x8xi32>
    %34 = vector.shape_cast %33 : vector<8x1x8xi32> to vector<8x8xi32>
    %35 = vector.extract_strided_slice %17 {offsets = [0, 3, 0], sizes = [8, 1, 8], strides = [1, 1, 1]} : vector<8x4x8xi32> to vector<8x1x8xi32>
    %36 = vector.shape_cast %35 : vector<8x1x8xi32> to vector<8x8xi32>
    %37 = tpu.concatenate %28, %30, %32, %34, %36 in 0 : vector<8x8xi32>, vector<8x8xi32>, vector<8x8xi32>, vector<8x8xi32>, vector<8x8xi32> -> vector<40x8xi32>
    %38 = arith.sitofp %37 : vector<40x8xi32> to vector<40x8xf32>
    %39 = tpu.iota {dimensions = array<i32: 1>} : vector<40x128xi32>
    %cst = arith.constant 0.000000e+00 : f32
    %40 = vector.broadcast %cst : f32 to vector<40x128xf32>
    %41 = vector.extract_strided_slice %27 {offsets = [0, 0], sizes = [40, 1], strides = [1, 1]} : vector<40x8xi32> to vector<40x1xi32>
    %42 = vector.broadcast %41 : vector<40x1xi32> to vector<40x128xi32>
    %43 = arith.cmpi eq, %39, %42 : vector<40x128xi32>
    %44 = vector.extract_strided_slice %38 {offsets = [0, 0], sizes = [40, 1], strides = [1, 1]} : vector<40x8xf32> to vector<40x1xf32>
    %cst_19 = arith.constant 0.000000e+00 : f32
    %45 = vector.shape_cast %44 : vector<40x1xf32> to vector<40x1xf32>
    %46 = vector.broadcast %45 : vector<40x1xf32> to vector<40x128xf32>
    %47 = vector.broadcast %cst_19 : f32 to vector<40x128xf32>
    %48 = arith.select %43, %46, %47 : vector<40x128xi1>, vector<40x128xf32>
    %49 = arith.addf %40, %48 : vector<40x128xf32>
    %50 = vector.extract_strided_slice %27 {offsets = [0, 1], sizes = [40, 1], strides = [1, 1]} : vector<40x8xi32> to vector<40x1xi32>
    %51 = vector.broadcast %50 : vector<40x1xi32> to vector<40x128xi32>
    %52 = arith.cmpi eq, %39, %51 : vector<40x128xi32>
    %53 = vector.extract_strided_slice %38 {offsets = [0, 1], sizes = [40, 1], strides = [1, 1]} : vector<40x8xf32> to vector<40x1xf32>
    %cst_20 = arith.constant 0.000000e+00 : f32
    %54 = vector.shape_cast %53 : vector<40x1xf32> to vector<40x1xf32>
    %55 = vector.broadcast %54 : vector<40x1xf32> to vector<40x128xf32>
    %56 = vector.broadcast %cst_20 : f32 to vector<40x128xf32>
    %57 = arith.select %52, %55, %56 : vector<40x128xi1>, vector<40x128xf32>
    %58 = arith.addf %49, %57 : vector<40x128xf32>
    %59 = vector.extract_strided_slice %27 {offsets = [0, 2], sizes = [40, 1], strides = [1, 1]} : vector<40x8xi32> to vector<40x1xi32>
    %60 = vector.broadcast %59 : vector<40x1xi32> to vector<40x128xi32>
    %61 = arith.cmpi eq, %39, %60 : vector<40x128xi32>
    %62 = vector.extract_strided_slice %38 {offsets = [0, 2], sizes = [40, 1], strides = [1, 1]} : vector<40x8xf32> to vector<40x1xf32>
    %cst_21 = arith.constant 0.000000e+00 : f32
    %63 = vector.shape_cast %62 : vector<40x1xf32> to vector<40x1xf32>
    %64 = vector.broadcast %63 : vector<40x1xf32> to vector<40x128xf32>
    %65 = vector.broadcast %cst_21 : f32 to vector<40x128xf32>
    %66 = arith.select %61, %64, %65 : vector<40x128xi1>, vector<40x128xf32>
    %67 = arith.addf %58, %66 : vector<40x128xf32>
    %68 = vector.extract_strided_slice %27 {offsets = [0, 3], sizes = [40, 1], strides = [1, 1]} : vector<40x8xi32> to vector<40x1xi32>
    %69 = vector.broadcast %68 : vector<40x1xi32> to vector<40x128xi32>
    %70 = arith.cmpi eq, %39, %69 : vector<40x128xi32>
    %71 = vector.extract_strided_slice %38 {offsets = [0, 3], sizes = [40, 1], strides = [1, 1]} : vector<40x8xf32> to vector<40x1xf32>
    %cst_22 = arith.constant 0.000000e+00 : f32
    %72 = vector.shape_cast %71 : vector<40x1xf32> to vector<40x1xf32>
    %73 = vector.broadcast %72 : vector<40x1xf32> to vector<40x128xf32>
    %74 = vector.broadcast %cst_22 : f32 to vector<40x128xf32>
    %75 = arith.select %70, %73, %74 : vector<40x128xi1>, vector<40x128xf32>
    %76 = arith.addf %67, %75 : vector<40x128xf32>
    %77 = vector.extract_strided_slice %27 {offsets = [0, 4], sizes = [40, 1], strides = [1, 1]} : vector<40x8xi32> to vector<40x1xi32>
    %78 = vector.broadcast %77 : vector<40x1xi32> to vector<40x128xi32>
    %79 = arith.cmpi eq, %39, %78 : vector<40x128xi32>
    %80 = vector.extract_strided_slice %38 {offsets = [0, 4], sizes = [40, 1], strides = [1, 1]} : vector<40x8xf32> to vector<40x1xf32>
    %cst_23 = arith.constant 0.000000e+00 : f32
    %81 = vector.shape_cast %80 : vector<40x1xf32> to vector<40x1xf32>
    %82 = vector.broadcast %81 : vector<40x1xf32> to vector<40x128xf32>
    %83 = vector.broadcast %cst_23 : f32 to vector<40x128xf32>
    %84 = arith.select %79, %82, %83 : vector<40x128xi1>, vector<40x128xf32>
    %85 = arith.addf %76, %84 : vector<40x128xf32>
    %86 = vector.extract_strided_slice %27 {offsets = [0, 5], sizes = [40, 1], strides = [1, 1]} : vector<40x8xi32> to vector<40x1xi32>
    %87 = vector.broadcast %86 : vector<40x1xi32> to vector<40x128xi32>
    %88 = arith.cmpi eq, %39, %87 : vector<40x128xi32>
    %89 = vector.extract_strided_slice %38 {offsets = [0, 5], sizes = [40, 1], strides = [1, 1]} : vector<40x8xf32> to vector<40x1xf32>
    %cst_24 = arith.constant 0.000000e+00 : f32
    %90 = vector.shape_cast %89 : vector<40x1xf32> to vector<40x1xf32>
    %91 = vector.broadcast %90 : vector<40x1xf32> to vector<40x128xf32>
    %92 = vector.broadcast %cst_24 : f32 to vector<40x128xf32>
    %93 = arith.select %88, %91, %92 : vector<40x128xi1>, vector<40x128xf32>
    %94 = arith.addf %85, %93 : vector<40x128xf32>
    %95 = vector.extract_strided_slice %27 {offsets = [0, 6], sizes = [40, 1], strides = [1, 1]} : vector<40x8xi32> to vector<40x1xi32>
    %96 = vector.broadcast %95 : vector<40x1xi32> to vector<40x128xi32>
    %97 = arith.cmpi eq, %39, %96 : vector<40x128xi32>
    %98 = vector.extract_strided_slice %38 {offsets = [0, 6], sizes = [40, 1], strides = [1, 1]} : vector<40x8xf32> to vector<40x1xf32>
    %cst_25 = arith.constant 0.000000e+00 : f32
    %99 = vector.shape_cast %98 : vector<40x1xf32> to vector<40x1xf32>
    %100 = vector.broadcast %99 : vector<40x1xf32> to vector<40x128xf32>
    %101 = vector.broadcast %cst_25 : f32 to vector<40x128xf32>
    %102 = arith.select %97, %100, %101 : vector<40x128xi1>, vector<40x128xf32>
    %103 = arith.addf %94, %102 : vector<40x128xf32>
    %104 = vector.extract_strided_slice %27 {offsets = [0, 7], sizes = [40, 1], strides = [1, 1]} : vector<40x8xi32> to vector<40x1xi32>
    %105 = vector.broadcast %104 : vector<40x1xi32> to vector<40x128xi32>
    %106 = arith.cmpi eq, %39, %105 : vector<40x128xi32>
    %107 = vector.extract_strided_slice %38 {offsets = [0, 7], sizes = [40, 1], strides = [1, 1]} : vector<40x8xf32> to vector<40x1xf32>
    %cst_26 = arith.constant 0.000000e+00 : f32
    %108 = vector.shape_cast %107 : vector<40x1xf32> to vector<40x1xf32>
    %109 = vector.broadcast %108 : vector<40x1xf32> to vector<40x128xf32>
    %110 = vector.broadcast %cst_26 : f32 to vector<40x128xf32>
    %111 = arith.select %106, %109, %110 : vector<40x128xi1>, vector<40x128xf32>
    %112 = arith.addf %103, %111 : vector<40x128xf32>
    %cst_27 = arith.constant dense<0.000000e+00> : vector<40xf32>
    %113 = vector.multi_reduction <add>, %38, %cst_27 [1] : vector<40x8xf32> to vector<40xf32>
    %114 = vector.shape_cast %113 : vector<40xf32> to vector<40x1xf32>
    %115 = arith.truncf %112 : vector<40x128xf32> to vector<40x128xbf16>
    %cst_28 = arith.constant dense<0.000000e+00> : vector<40x32xf32>
    %116 = tpu.matmul %115, %1, %cst_28 {dimension_numbers = #tpu.dot_dimension_numbers<[1], [0], [0], [1], [0, 0, 1, 1], [], []>} : vector<40x128xbf16>, vector<128x32xbf16>, vector<40x32xf32> -> vector<40x32xf32>
    %cst_29 = arith.constant 1.000000e+00 : f32
    %117 = vector.broadcast %cst_29 : f32 to vector<40x1xf32>
    %118 = arith.maximumf %114, %117 : vector<40x1xf32>
    %119 = tpu.reciprocal %118 {approx = true} : vector<40x1xf32> -> vector<40x1xf32>
    %120 = vector.broadcast %119 : vector<40x1xf32> to vector<40x32xf32>
    %121 = arith.mulf %116, %120 : vector<40x32xf32>
    %cst_30 = arith.constant dense<0.000000e+00> : vector<40x32xf32>
    %122 = tpu.matmul %121, %2, %cst_30 {dimension_numbers = #tpu.dot_dimension_numbers<[1], [0], [0], [1], [0, 0, 1, 1], [], []>} : vector<40x32xf32>, vector<32x32xf32>, vector<40x32xf32> -> vector<40x32xf32>
    %123 = vector.broadcast %10 : vector<1x32xf32> to vector<40x32xf32>
    %124 = arith.addf %122, %123 : vector<40x32xf32>
    %125 = math.tanh %124 : vector<40x32xf32>
    %126 = vector.extract_strided_slice %125 {offsets = [0, 0], sizes = [8, 32], strides = [1, 1]} : vector<40x32xf32> to vector<8x32xf32>
    %127 = vector.extract_strided_slice %125 {offsets = [8, 0], sizes = [32, 32], strides = [1, 1]} : vector<40x32xf32> to vector<32x32xf32>
    %cst_31 = arith.constant dense<0.000000e+00> : vector<8x24xf32>
    %128 = tpu.matmul %126, %3, %cst_31 {dimension_numbers = #tpu.dot_dimension_numbers<[1], [0], [0], [1], [0, 0, 1, 1], [], []>} : vector<8x32xf32>, vector<32x24xf32>, vector<8x24xf32> -> vector<8x24xf32>
    %129 = vector.broadcast %11 : vector<1x24xf32> to vector<8x24xf32>
    %130 = arith.addf %128, %129 : vector<8x24xf32>
    %cst_32 = arith.constant dense<0.000000e+00> : vector<32x24xf32>
    %131 = tpu.matmul %127, %4, %cst_32 {dimension_numbers = #tpu.dot_dimension_numbers<[1], [0], [0], [1], [0, 0, 1, 1], [], []>} : vector<32x32xf32>, vector<32x24xf32>, vector<32x24xf32> -> vector<32x24xf32>
    %cst_33 = arith.constant dense<0.000000e+00> : vector<32x24xf32>
    %132 = tpu.matmul %127, %5, %cst_33 {dimension_numbers = #tpu.dot_dimension_numbers<[1], [0], [0], [1], [0, 0, 1, 1], [], []>} : vector<32x32xf32>, vector<32x24xf32>, vector<32x24xf32> -> vector<32x24xf32>
    %cst_34 = arith.constant dense<0.000000e+00> : vector<32x24xf32>
    %133 = tpu.matmul %127, %6, %cst_34 {dimension_numbers = #tpu.dot_dimension_numbers<[1], [0], [0], [1], [0, 0, 1, 1], [], []>} : vector<32x32xf32>, vector<32x24xf32>, vector<32x24xf32> -> vector<32x24xf32>
    %134 = tpu.iota {dimensions = array<i32: 1>} : vector<8x24xi32>
    %135 = vector.extract_strided_slice %131 {offsets = [0, 0], sizes = [8, 24], strides = [1, 1]} : vector<32x24xf32> to vector<8x24xf32>
    %136 = vector.extract_strided_slice %132 {offsets = [8, 0], sizes = [8, 24], strides = [1, 1]} : vector<32x24xf32> to vector<8x24xf32>
    %137 = arith.addf %135, %136 : vector<8x24xf32>
    %138 = vector.extract_strided_slice %133 {offsets = [16, 0], sizes = [8, 24], strides = [1, 1]} : vector<32x24xf32> to vector<8x24xf32>
    %139 = arith.addf %137, %138 : vector<8x24xf32>
    %140 = vector.extract_strided_slice %131 {offsets = [8, 0], sizes = [8, 24], strides = [1, 1]} : vector<32x24xf32> to vector<8x24xf32>
    %141 = vector.extract_strided_slice %132 {offsets = [16, 0], sizes = [8, 24], strides = [1, 1]} : vector<32x24xf32> to vector<8x24xf32>
    %142 = arith.addf %140, %141 : vector<8x24xf32>
    %143 = vector.extract_strided_slice %133 {offsets = [24, 0], sizes = [8, 24], strides = [1, 1]} : vector<32x24xf32> to vector<8x24xf32>
    %144 = arith.addf %142, %143 : vector<8x24xf32>
    %145 = arith.maximumf %139, %144 : vector<8x24xf32>
    %146 = vector.extract_strided_slice %131 {offsets = [16, 0], sizes = [8, 24], strides = [1, 1]} : vector<32x24xf32> to vector<8x24xf32>
    %147 = vector.extract_strided_slice %132 {offsets = [24, 0], sizes = [8, 24], strides = [1, 1]} : vector<32x24xf32> to vector<8x24xf32>
    %148 = arith.addf %146, %147 : vector<8x24xf32>
    %c16_i32 = arith.constant 16 : i32
    %149 = vector.broadcast %c16_i32 : i32 to vector<8x24xi32>
    %150 = arith.cmpi slt, %134, %149 : vector<8x24xi32>
    %cst_35 = arith.constant -1.000000e+30 : f32
    %151 = vector.broadcast %cst_35 : f32 to vector<8x24xf32>
    %152 = arith.select %150, %148, %151 : vector<8x24xi1>, vector<8x24xf32>
    %153 = arith.maximumf %145, %152 : vector<8x24xf32>
    %154 = vector.extract_strided_slice %131 {offsets = [24, 0], sizes = [8, 24], strides = [1, 1]} : vector<32x24xf32> to vector<8x24xf32>
    %c8_i32 = arith.constant 8 : i32
    %155 = vector.broadcast %c8_i32 : i32 to vector<8x24xi32>
    %156 = arith.cmpi slt, %134, %155 : vector<8x24xi32>
    %cst_36 = arith.constant -1.000000e+30 : f32
    %157 = vector.broadcast %cst_36 : f32 to vector<8x24xf32>
    %158 = arith.select %156, %154, %157 : vector<8x24xi1>, vector<8x24xf32>
    %159 = arith.maximumf %153, %158 : vector<8x24xf32>
    %160 = vector.broadcast %12 : vector<1x24xf32> to vector<8x24xf32>
    %161 = arith.addf %159, %160 : vector<8x24xf32>
    %cst_37 = arith.constant 0.000000e+00 : f32
    %162 = vector.broadcast %cst_37 : f32 to vector<8x24xf32>
    %163 = arith.maximumf %161, %162 : vector<8x24xf32>
    %cst_38 = arith.constant dense<0.000000e+00> : vector<8x16xf32>
    %164 = tpu.matmul %130, %7, %cst_38 {dimension_numbers = #tpu.dot_dimension_numbers<[1], [0], [0], [1], [0, 0, 1, 1], [], []>} : vector<8x24xf32>, vector<24x16xf32>, vector<8x16xf32> -> vector<8x16xf32>
    %cst_39 = arith.constant dense<0.000000e+00> : vector<8x16xf32>
    %165 = tpu.matmul %163, %8, %cst_39 {dimension_numbers = #tpu.dot_dimension_numbers<[1], [0], [0], [1], [0, 0, 1, 1], [], []>} : vector<8x24xf32>, vector<24x16xf32>, vector<8x16xf32> -> vector<8x16xf32>
    %166 = arith.addf %164, %165 : vector<8x16xf32>
    %167 = vector.broadcast %13 : vector<1x16xf32> to vector<8x16xf32>
    %168 = arith.addf %166, %167 : vector<8x16xf32>
    %cst_40 = arith.constant 0.000000e+00 : f32
    %169 = vector.broadcast %cst_40 : f32 to vector<8x16xf32>
    %170 = arith.maximumf %168, %169 : vector<8x16xf32>
    %171 = vector.broadcast %15 : vector<1x16xf32> to vector<8x16xf32>
    %172 = arith.mulf %170, %171 : vector<8x16xf32>
    %cst_41 = arith.constant dense<0.000000e+00> : vector<8xf32>
    %173 = vector.multi_reduction <add>, %172, %cst_41 [1] : vector<8x16xf32> to vector<8xf32>
    %174 = vector.shape_cast %173 : vector<8xf32> to vector<8x1xf32>
    %175 = vector.broadcast %14 : vector<1x1xf32> to vector<8x1xf32>
    %176 = arith.addf %174, %175 : vector<8x1xf32>
    %177 = arith.negf %176 : vector<8x1xf32>
    %178 = math.exp %177 : vector<8x1xf32>
    %cst_42 = arith.constant 1.000000e+00 : f32
    %179 = vector.broadcast %cst_42 : f32 to vector<8x1xf32>
    %180 = arith.addf %179, %178 : vector<8x1xf32>
    %181 = arith.divf %179, %180 : vector<8x1xf32>
    %182 = vector.shape_cast %181 : vector<8x1xf32> to vector<8x1xf32>
    %183 = vector.broadcast %182 : vector<8x1xf32> to vector<8x128xf32>
    %c0_43 = arith.constant 0 : index
    %c0_44 = arith.constant 0 : index
    %184 = vector.load %arg6[%c0_43, %c0_44] : memref<8x128xf32, #tpu.memory_space<vmem>>, vector<8x128xf32>
    tpu.vector_store %arg6[%c0_43, %c0_44], %183 {strides = array<i32>} : memref<8x128xf32, #tpu.memory_space<vmem>>, vector<8x128xf32>,
    return
  }
  func.func @transform_0(%arg0: i32) -> (i32, i32) {
    %c0_i32 = arith.constant 0 : i32
    %c0_i32_0 = arith.constant 0 : i32
    return %arg0, %c0_i32 : i32, i32
  }
  func.func @transform_1(%arg0: i32) -> (i32, i32) {
    %c0_i32 = arith.constant 0 : i32
    %c0_i32_0 = arith.constant 0 : i32
    return %arg0, %c0_i32 : i32, i32
  }
  func.func @transform_2(%arg0: i32) -> (i32, i32, i32) {
    %c0_i32 = arith.constant 0 : i32
    %c0_i32_0 = arith.constant 0 : i32
    %c0_i32_1 = arith.constant 0 : i32
    return %arg0, %c0_i32, %c0_i32_0 : i32, i32, i32
  }
  func.func @transform_3(%arg0: i32) -> (i32, i32, i32) {
    %c0_i32 = arith.constant 0 : i32
    %c0_i32_0 = arith.constant 0 : i32
    %c0_i32_1 = arith.constant 0 : i32
    return %arg0, %c0_i32, %c0_i32_0 : i32, i32, i32
  }
  func.func @transform_4(%arg0: i32) -> (i32, i32) {
    %c0_i32 = arith.constant 0 : i32
    %c0_i32_0 = arith.constant 0 : i32
    %c0_i32_1 = arith.constant 0 : i32
    return %c0_i32, %c0_i32_0 : i32, i32
  }
  func.func @transform_5(%arg0: i32) -> (i32, i32) {
    %c0_i32 = arith.constant 0 : i32
    %c0_i32_0 = arith.constant 0 : i32
    return %arg0, %c0_i32 : i32, i32
  }
}

</mosaic_0001>

<llo_original>
// kernel: codebert4jit_forward.1
$region0: #{codebert4jit_forward.1}
  #allocation0 [shape = 'u32[]', space=smem, size = 0x4, offset = 0x4, fixed_abs, tag = 'smem constant byte address 0x4 - core index']
  #allocation1 [shape = 'u32[72,128]{1,0:T(1,128)}', space=vmem, size = 0x9000, scoped, tag = 'internal scratch']
  %s0 = inlined_call_operand.vmem [shape: s32[16,8], index: 0, kind: input, shape index: {}]
  %s1 = inlined_call_operand.vmem [shape: s32[16,8], index: 1, kind: input, shape index: {}]
  %s2 = inlined_call_operand.vmem [shape: s32[16,4,8], index: 2, kind: input, shape index: {}]
  %s3 = inlined_call_operand.vmem [shape: s32[16,4,8], index: 3, kind: input, shape index: {}]
  %s4 = inlined_call_operand.hbm [shape: f32[344,128], index: 4, kind: input, shape index: {}]
  %s5 = inlined_call_operand.vmem [shape: f32[16,128], index: 5, kind: output, shape index: {}]
  %s6 = sld [smem:[#allocation0]]
  $region57: #{codebert4jit_forward.1} parent=0
    _
  %s8 = ssub.s32 1, %s6
  %s9 = scalar_select 0, %s8, %s6
  $region1: #{codebert4jit_forward.1} parent=0
    #allocation2 [shape = 'u8[176128]{0}', space=vmem, size = 0x2b000, scoped, tag = 'input window, operand 4, single buffered']
    #allocation3 [shape = 's32[2]{0}', space=sflag, size = 0x8, scoped, tag = 'scoped memory for codebert4jit_forward.1']
    %10 = vsyncpa [#allocation3], 0
    loop: start=0, step=1, limit=4
    $region2: #{codebert4jit_forward.1} parent=1 // loop_pre_header
      _
    $region3: #{codebert4jit_forward.1} parent=1 // loop_header
      %s12 = sphi 0, %s16
      %p13 = scmp.ge.s32.totalorder %s12, 4
      %s22 = sphi 0, %s24
      %s25 = sphi 0, %s22
      %s26 = sphi 0, %s25
      %s42 = sphi 0, %s26
      %s48 = sphi 0, %s50
      %s51 = sphi 0, %s48
      %s52 = sphi 0, %s51
      %s68 = sphi 0, %s52
      %s74 = sphi 0, %s76
      %s77 = sphi 0, %s74
      %s78 = sphi 0, %s77
      %s94 = sphi 0, %s78
      %s100 = sphi 0, %s102
      %s103 = sphi 0, %s100
      %s104 = sphi 0, %s103
      %s120 = sphi 0, %s104
      %s124 = sphi 0, %s124
      %s126 = sphi 0, %s124
      %s127 = sphi 0, %s126
      %s141 = sphi 0, %s127
      %s147 = sphi 0, %s149
      %s150 = sphi 0, %s147
      %s151 = sphi 0, %s150
      %s167 = sphi 0, %s151
    $region4: #{codebert4jit_forward.1} parent=1 // loop_header_branch
      %15 = sbr.rel (%p13) target = $region8
    $region5: #{codebert4jit_forward.1} parent=1 // loop_body
      %s17 = ssub.s32 %s12, 1
      %s18 = ssub.s32 %s12, 2
      %s19 = sadd.s32 %s12, 1
      %s20 = ssub.s32 %s12, %s19
      %p21 = scmp.eq.s32.totalorder %s20, 0
      %s23 = sadd.s32 %s22, 1
      %s24 = scalar_select %p21, %s22, %s23
      %p27 = pneg %p21
      %p28 = scmp.eq.s32.totalorder %s12, 1
      %p29 = por %p27, %p28
      %p30 = scmp.ne.s32.totalorder %s22, %s25
      %p31 = scmp.eq.s32.totalorder %s12, 0
      %p32 = por %p30, %p31
      %p33 = scmp.ne.s32.totalorder %s22, %s25
      %p34 = scmp.eq.s32.totalorder %s17, 1
      %p35 = por %p33, %p34
      %p36 = scmp.ne.s32.totalorder %s25, %s26
      %p37 = scmp.eq.s32.totalorder %s17, 0
      %p38 = por %p36, %p37
      %p39 = scmp.ne.s32.totalorder %s25, %s26
      %p40 = scmp.eq.s32.totalorder %s18, 1
      %p41 = por %p39, %p40
      %p43 = scmp.ne.s32.totalorder %s26, %s42
      %p44 = scmp.eq.s32.totalorder %s18, 0
      %p45 = por %p43, %p44
      %s46 = ssub.s32 %s12, %s19
      %p47 = scmp.eq.s32.totalorder %s46, 0
      %s49 = sadd.s32 %s48, 1
      %s50 = scalar_select %p47, %s48, %s49
      %p53 = pneg %p47
      %p54 = scmp.eq.s32.totalorder %s12, 1
      %p55 = por %p53, %p54
      %p56 = scmp.ne.s32.totalorder %s48, %s51
      %p57 = scmp.eq.s32.totalorder %s12, 0
      %p58 = por %p56, %p57
      %p59 = scmp.ne.s32.totalorder %s48, %s51
      %p60 = scmp.eq.s32.totalorder %s17, 1
      %p61 = por %p59, %p60
      %p62 = scmp.ne.s32.totalorder %s51, %s52
      %p63 = scmp.eq.s32.totalorder %s17, 0
      %p64 = por %p62, %p63
      %p65 = scmp.ne.s32.totalorder %s51, %s52
      %p66 = scmp.eq.s32.totalorder %s18, 1
      %p67 = por %p65, %p66
      %p69 = scmp.ne.s32.totalorder %s52, %s68
      %p70 = scmp.eq.s32.totalorder %s18, 0
      %p71 = por %p69, %p70
      %s72 = ssub.s32 %s12, %s19
      %p73 = scmp.eq.s32.totalorder %s72, 0
      %s75 = sadd.s32 %s74, 1
      %s76 = scalar_select %p73, %s74, %s75
      %p79 = pneg %p73
      %p80 = scmp.eq.s32.totalorder %s12, 1
      %p81 = por %p79, %p80
      %p82 = scmp.ne.s32.totalorder %s74, %s77
      %p83 = scmp.eq.s32.totalorder %s12, 0
      %p84 = por %p82, %p83
      %p85 = scmp.ne.s32.totalorder %s74, %s77
      %p86 = scmp.eq.s32.totalorder %s17, 1
      %p87 = por %p85, %p86
      %p88 = scmp.ne.s32.totalorder %s77, %s78
      %p89 = scmp.eq.s32.totalorder %s17, 0
      %p90 = por %p88, %p89
      %p91 = scmp.ne.s32.totalorder %s77, %s78
      %p92 = scmp.eq.s32.totalorder %s18, 1
      %p93 = por %p91, %p92
      %p95 = scmp.ne.s32.totalorder %s78, %s94
      %p96 = scmp.eq.s32.totalorder %s18, 0
      %p97 = por %p95, %p96
      %s98 = ssub.s32 %s12, %s19
      %p99 = scmp.eq.s32.totalorder %s98, 0
      %s101 = sadd.s32 %s100, 1
      %s102 = scalar_select %p99, %s100, %s101
      %p105 = pneg %p99
      %p106 = scmp.eq.s32.totalorder %s12, 1
      %p107 = por %p105, %p106
      %p108 = scmp.ne.s32.totalorder %s100, %s103
      %p109 = scmp.eq.s32.totalorder %s12, 0
      %p110 = por %p108, %p109
      %p111 = scmp.ne.s32.totalorder %s100, %s103
      %p112 = scmp.eq.s32.totalorder %s17, 1
      %p113 = por %p111, %p112
      %p114 = scmp.ne.s32.totalorder %s103, %s104
      %p115 = scmp.eq.s32.totalorder %s17, 0
      %p116 = por %p114, %p115
      %p117 = scmp.ne.s32.totalorder %s103, %s104
      %p118 = scmp.eq.s32.totalorder %s18, 1
      %p119 = por %p117, %p118
      %p121 = scmp.ne.s32.totalorder %s104, %s120
      %p122 = scmp.eq.s32.totalorder %s18, 0
      %p123 = por %p121, %p122
      %s125 = sadd.s32 %s124, 1
      %p128 = scmp.eq.s32.totalorder %s12, 1
      %p129 = scmp.ne.s32.totalorder %s124, %s126
      %p130 = scmp.eq.s32.totalorder %s12, 0
      %p131 = por %p129, %p130
      %p132 = scmp.ne.s32.totalorder %s124, %s126
      %p133 = scmp.eq.s32.totalorder %s17, 1
      %p134 = por %p132, %p133
      %p135 = scmp.ne.s32.totalorder %s126, %s127
      %p136 = scmp.eq.s32.totalorder %s17, 0
      %p137 = por %p135, %p136
      %p138 = scmp.ne.s32.totalorder %s126, %s127
      %p139 = scmp.eq.s32.totalorder %s18, 1
      %p140 = por %p138, %p139
      %p142 = scmp.ne.s32.totalorder %s127, %s141
      %p143 = scmp.eq.s32.totalorder %s18, 0
      %p144 = por %p142, %p143
      %s145 = ssub.s32 %s12, %s19
      %p146 = scmp.eq.s32.totalorder %s145, 0
      %s148 = sadd.s32 %s147, 1
      %s149 = scalar_select %p146, %s147, %s148
      %p152 = pneg %p146
      %p153 = scmp.eq.s32.totalorder %s12, 1
      %p154 = por %p152, %p153
      %p155 = scmp.ne.s32.totalorder %s147, %s150
      %p156 = scmp.eq.s32.totalorder %s12, 0
      %p157 = por %p155, %p156
      %p158 = scmp.ne.s32.totalorder %s147, %s150
      %p159 = scmp.eq.s32.totalorder %s17, 1
      %p160 = por %p158, %p159
      %p161 = scmp.ne.s32.totalorder %s150, %s151
      %p162 = scmp.eq.s32.totalorder %s17, 0
      %p163 = por %p161, %p162
      %p164 = scmp.ne.s32.totalorder %s150, %s151
      %p165 = scmp.eq.s32.totalorder %s18, 1
      %p166 = por %p164, %p165
      %p168 = scmp.ne.s32.totalorder %s151, %s167
      %p169 = scmp.eq.s32.totalorder %s18, 0
      %p170 = por %p168, %p169
      %p171 = scmp.le.s32.totalorder 1, %s12
      %p172 = scmp.lt.s32.totalorder %s12, 3
      %p173 = pnand %p171, %p172
      %p174 = pneg %p173
      // Predicated region
      $region9: #{codebert4jit_forward.1} parent=5 // pred_check
        _
      $region10: #{codebert4jit_forward.1} parent=5 // pred_check_branch
        %176 = sbr.rel (%p173) target = $region12
      $region11: #{codebert4jit_forward.1} parent=5 // pred_region
        %s177 = ssub.s32 %s12, 1
        // Predicated region
        $region13: #{codebert4jit_forward.1} parent=11 // pred_check
          %p178 = pneg %p137
        $region14: #{codebert4jit_forward.1} parent=11 // pred_check_branch
          %180 = sbr.rel (%p178) target = $region16
        $region15: #{codebert4jit_forward.1} parent=11 // pred_region
          %182 = vsyncadd [#allocation3], 0
          %s183 = sshll.u32 %s4, 4
          %s184 = int_to_ptr.hbm [resolvable:$true] %s183
          %s185 = sshll.u32 [#allocation2], 4
          %s186 = int_to_ptr.vmem [resolvable:$true] %s185
          %191 = dma.hbm_to_vmem [thread:$0]  %s184, 5504, %s186, [#allocation3], 128, 128, 8
        $region16: #{codebert4jit_forward.1} parent=11 // pred_fallthru
          _
      $region12: #{codebert4jit_forward.1} parent=5 // pred_fallthru
        _
      %p192 = scmp.lt.s32.totalorder %s12, 2
      // Predicated region
      $region17: #{codebert4jit_forward.1} parent=5 // pred_check
        %p193 = pneg %p192
      $region18: #{codebert4jit_forward.1} parent=5 // pred_check_branch
        %195 = sbr.rel (%p193) target = $region20
      $region19: #{codebert4jit_forward.1} parent=5 // pred_region
        // Predicated region
        $region21: #{codebert4jit_forward.1} parent=19 // pred_check
          %p196 = pneg %p32
        $region22: #{codebert4jit_forward.1} parent=19 // pred_check_branch
          %198 = sbr.rel (%p196) target = $region24
        $region23: #{codebert4jit_forward.1} parent=19 // pred_region
          %p199 = scmp.lt.s32.totalorder %s12, 1
          %s200 = scalar_select %p199, %s12, 1
          %s201 = smul.addr %s200, 8
          %s202 = scalar_lea.vmem %s0, %s201
        $region24: #{codebert4jit_forward.1} parent=19 // pred_fallthru
          _
        // Predicated region
        $region25: #{codebert4jit_forward.1} parent=19 // pred_check
          %p203 = pneg %p58
        $region26: #{codebert4jit_forward.1} parent=19 // pred_check_branch
          %205 = sbr.rel (%p203) target = $region28
        $region27: #{codebert4jit_forward.1} parent=19 // pred_region
          %p206 = scmp.lt.s32.totalorder %s12, 1
          %s207 = scalar_select %p206, %s12, 1
          %s208 = smul.addr %s207, 8
          %s209 = scalar_lea.vmem %s1, %s208
        $region28: #{codebert4jit_forward.1} parent=19 // pred_fallthru
          _
        // Predicated region
        $region29: #{codebert4jit_forward.1} parent=19 // pred_check
          %p210 = pneg %p84
        $region30: #{codebert4jit_forward.1} parent=19 // pred_check_branch
          %212 = sbr.rel (%p210) target = $region32
        $region31: #{codebert4jit_forward.1} parent=19 // pred_region
          %s213 = smul.u32 8, %s12
          %p214 = scmp.lt.s32.totalorder %s213, 15
          %s215 = scalar_select %p214, %s213, 15
          %s216 = smul.addr %s215, 4
          %s217 = scalar_lea.vmem %s2, %s216
          %s218 = smul.u32 8, %s12
        $region32: #{codebert4jit_forward.1} parent=19 // pred_fallthru
          _
        // Predicated region
        $region33: #{codebert4jit_forward.1} parent=19 // pred_check
          %p219 = pneg %p110
        $region34: #{codebert4jit_forward.1} parent=19 // pred_check_branch
          %221 = sbr.rel (%p219) target = $region36
        $region35: #{codebert4jit_forward.1} parent=19 // pred_region
          %s222 = smul.u32 8, %s12
          %p223 = scmp.lt.s32.totalorder %s222, 15
          %s224 = scalar_select %p223, %s222, 15
          %s225 = smul.addr %s224, 4
          %s226 = scalar_lea.vmem %s3, %s225
          %s227 = smul.u32 8, %s12
        $region36: #{codebert4jit_forward.1} parent=19 // pred_fallthru
          _
      $region20: #{codebert4jit_forward.1} parent=5 // pred_fallthru
        _
      %p228 = scmp.le.s32.totalorder 1, %s12
      %p229 = scmp.lt.s32.totalorder %s12, 3
      %p230 = pnand %p228, %p229
      %p231 = pneg %p230
      // Predicated region
      $region37: #{codebert4jit_forward.1} parent=5 // pred_check
        _
      $region38: #{codebert4jit_forward.1} parent=5 // pred_check_branch
        %233 = sbr.rel (%p230) target = $region40
      $region39: #{codebert4jit_forward.1} parent=5 // pred_region
        %s234 = ssub.s32 %s12, 1
        // Predicated region
        $region41: #{codebert4jit_forward.1} parent=39 // pred_check
          %p235 = pneg %p137
        $region42: #{codebert4jit_forward.1} parent=39 // pred_check_branch
          %237 = sbr.rel (%p235) target = $region44
        $region43: #{codebert4jit_forward.1} parent=39 // pred_region
          %239 = dma.done [#allocation3], 5504
        $region44: #{codebert4jit_forward.1} parent=39 // pred_fallthru
          _
        %p240 = scmp.lt.s32.totalorder %s17, 1
        %s241 = scalar_select %p240, %s17, 1
        %s242 = smul.addr %s241, 8
        %s243 = scalar_lea.vmem %s0, %s242
        %p244 = pneg %p38
        %p245 = pneg %p35
        %p246 = scmp.lt.s32.totalorder %s17, 1
        %s247 = scalar_select %p246, %s17, 1
        %s248 = smul.addr %s247, 8
        %s249 = scalar_lea.vmem %s1, %s248
        %p250 = pneg %p64
        %p251 = pneg %p61
        %s252 = smul.u32 8, %s17
        %p253 = scmp.lt.s32.totalorder %s252, 15
        %s254 = scalar_select %p253, %s252, 15
        %s255 = smul.addr %s254, 4
        %s256 = scalar_lea.vmem %s2, %s255
        %p257 = pneg %p90
        %p258 = pneg %p87
        %s259 = smul.u32 8, %s17
        %p260 = scmp.lt.s32.totalorder %s259, 15
        %s261 = scalar_select %p260, %s259, 15
        %s262 = smul.addr %s261, 4
        %s263 = scalar_lea.vmem %s3, %s262
        %p264 = pneg %p116
        %p265 = pneg %p113
        %p266 = pneg %p137
        %p267 = pneg %p134
        %p268 = pneg %p163
        %p269 = pneg %p160
        %p270 = scmp.lt.s32.totalorder %s17, 1
        %s271 = scalar_select %p270, %s17, 1
        %s272 = smul.addr %s271, 8
        %s273 = scalar_lea.vmem %s5, %s272
        %p274 = scmp.lt.s32.totalorder %s17, 1
        %s275 = scalar_select %p274, %s17, 1
        %s276 = smul.addr %s275, 8
        %s277 = scalar_lea.vmem %s0, %s276
        %p278 = scmp.lt.s32.totalorder %s17, 1
        %s279 = scalar_select %p278, %s17, 1
        %s280 = smul.addr %s279, 8
        %s281 = scalar_lea.vmem %s1, %s280
        %s282 = smul.u32 8, %s17
        %p283 = scmp.lt.s32.totalorder %s282, 15
        %s284 = scalar_select %p283, %s282, 15
        %s285 = smul.addr %s284, 4
        %s286 = scalar_lea.vmem %s2, %s285
        %s287 = smul.u32 8, %s17
        %s288 = smul.u32 8, %s17
        %p289 = scmp.lt.s32.totalorder %s288, 15
        %s290 = scalar_select %p289, %s288, 15
        %s291 = smul.addr %s290, 4
        %s292 = scalar_lea.vmem %s3, %s291
        %s293 = smul.u32 8, %s17
        %p294 = scmp.lt.s32.totalorder %s17, 1
        %s295 = scalar_select %p294, %s17, 1
        %s296 = smul.addr %s295, 8
        %s297 = scalar_lea.vmem %s5, %s296
        %v298 = vld [vmem:[#allocation2] sm:$0xff]
        %v299 = vld [vmem:[#allocation2 + $0x8] sm:$0xff]
        %v300 = vld [vmem:[#allocation2 + $0x10] sm:$0xff]
        %v301 = vld [vmem:[#allocation2 + $0x18] sm:$0xff]
        %v302 = vld [vmem:[#allocation2 + $0x20] sm:$0xff]
        %v303 = vld [vmem:[#allocation2 + $0x28] sm:$0xff]
        %v304 = vld [vmem:[#allocation2 + $0x30] sm:$0xff]
        %v305 = vld [vmem:[#allocation2 + $0x38] sm:$0xff]
        %v306 = vld [vmem:[#allocation2 + $0x40] sm:$0xff]
        %v307 = vld [vmem:[#allocation2 + $0x48] sm:$0xff]
        %v308 = vld [vmem:[#allocation2 + $0x50] sm:$0xff]
        %v309 = vld [vmem:[#allocation2 + $0x58] sm:$0xff]
        %v310 = vld [vmem:[#allocation2 + $0x60] sm:$0xff]
        %v311 = vld [vmem:[#allocation2 + $0x68] sm:$0xff]
        %v312 = vld [vmem:[#allocation2 + $0x70] sm:$0xff]
        %v313 = vld [vmem:[#allocation2 + $0x78] sm:$0xff]
        %v314 = vpack.c.bf16 %v299, %v298
        %v315 = vpack.c.bf16 %v301, %v300
        %v316 = vpack.c.bf16 %v303, %v302
        %v317 = vpack.c.bf16 %v305, %v304
        %v318 = vpack.c.bf16 %v307, %v306
        %v319 = vpack.c.bf16 %v309, %v308
        %v320 = vpack.c.bf16 %v311, %v310
        %v321 = vpack.c.bf16 %v313, %v312
        %v322 = vld [vmem:[#allocation2 + $0x80] sm:$0xff]
        %v323 = vld [vmem:[#allocation2 + $0x88] sm:$0xff]
        %v324 = vld [vmem:[#allocation2 + $0x90] sm:$0xff]
        %v325 = vld [vmem:[#allocation2 + $0x98] sm:$0xff]
        %v326 = vld [vmem:[#allocation2 + $0xa0] sm:$0xff]
        %v327 = vld [vmem:[#allocation2 + $0xa8] sm:$0xff]
        %v328 = vld [vmem:[#allocation2 + $0xb0] sm:$0xff]
        %v329 = vld [vmem:[#allocation2 + $0xb8] sm:$0xff]
        %v330 = vld [vmem:[#allocation2 + $0xc0] sm:$0xff]
        %v331 = vld [vmem:[#allocation2 + $0xc8] sm:$0xff]
        %v332 = vld [vmem:[#allocation2 + $0xd0] sm:$0xff]
        %v333 = vld [vmem:[#allocation2 + $0xd8] sm:$0xff]
        %v334 = vld [vmem:[#allocation2 + $0xe0] sm:$0xff]
        %v335 = vld [vmem:[#allocation2 + $0xe8] sm:$0xff]
        %v336 = vld [vmem:[#allocation2 + $0xf0] sm:$0xff]
        %v337 = vld [vmem:[#allocation2 + $0xf8] sm:$0xff]
        %v338 = vld [vmem:[#allocation2 + $0x100] sm:$0xff]
        %v339 = vld [vmem:[#allocation2 + $0x108] sm:$0xff]
        %v340 = vld [vmem:[#allocation2 + $0x110] sm:$0xff]
        %v341 = vld [vmem:[#allocation2 + $0x118] sm:$0xff]
        %v342 = vld [vmem:[#allocation2 + $0x120] sm:$0xff]
        %v343 = vld [vmem:[#allocation2 + $0x128] sm:$0xff]
        %v344 = vld [vmem:[#allocation2 + $0x130] sm:$0xff]
        %v345 = vld [vmem:[#allocation2 + $0x138] sm:$0xff]
        %v346 = vld [vmem:[#allocation2 + $0x140] sm:$0xff]
        %v347 = vld [vmem:[#allocation2 + $0x148] sm:$0xff]
        %v348 = vld [vmem:[#allocation2 + $0x150] sm:$0xff]
        %v349 = vld [vmem:[%s286] sm:$0xf]
        %v350 = vld [vmem:[%s286 + $0x4] sm:$0xf]
        %v351 = vld [vmem:[%s286 + $0x8] sm:$0xf]
        %v352 = vld [vmem:[%s286 + $0xc] sm:$0xf]
        %v353 = vld [vmem:[%s286 + $0x10] sm:$0xf]
        %v354 = vld [vmem:[%s286 + $0x14] sm:$0xf]
        %v355 = vld [vmem:[%s286 + $0x18] sm:$0xf]
        %v356 = vld [vmem:[%s286 + $0x1c] sm:$0xf]
        %v357 = vld [vmem:[%s292] sm:$0xf]
        %v358 = vld [vmem:[%s292 + $0x4] sm:$0xf]
        %v359 = vld [vmem:[%s292 + $0x8] sm:$0xf]
        %v360 = vld [vmem:[%s292 + $0xc] sm:$0xf]
        %v361 = vld [vmem:[%s292 + $0x10] sm:$0xf]
        %v362 = vld [vmem:[%s292 + $0x14] sm:$0xf]
        %v363 = vld [vmem:[%s292 + $0x18] sm:$0xf]
        %v364 = vld [vmem:[%s292 + $0x1c] sm:$0xf]
        %v365 = vld [vmem:[%s277] sm:$0xff]
        %v366 = vrot.slane %v350, 7
        %vm367 = vcmask 1041409
        %v368 = vsel %vm367, %v366, %v349
        %v369 = vrot.slane %v351, 6
        %vm370 = vcmask 1042434
        %v371 = vsel %vm370, %v369, %v368
        %v372 = vrot.slane %v352, 5
        %vm373 = vcmask 1043459
        %v374 = vsel %vm373, %v372, %v371
        %v375 = vrot.slane %v353, 4
        %vm376 = vcmask 1044484
        %v377 = vsel %vm376, %v375, %v374
        %v378 = vrot.slane %v354, 3
        %vm379 = vcmask 1045509
        %v380 = vsel %vm379, %v378, %v377
        %v381 = vrot.slane %v355, 2
        %vm382 = vcmask 1046534
        %v383 = vsel %vm382, %v381, %v380
        %v384 = vrot.slane %v356, 1
        %vm385 = vcmask 1047559
        %v386 = vsel %vm385, %v384, %v383
        %v387 = vrot.slane %v349, 1
        %v388 = vsel %vm367, %v350, %v387
        %v389 = vrot.slane %v351, 7
        %v390 = vsel %vm370, %v389, %v388
        %v391 = vrot.slane %v352, 6
        %v392 = vsel %vm373, %v391, %v390
        %v393 = vrot.slane %v353, 5
        %v394 = vsel %vm376, %v393, %v392
        %v395 = vrot.slane %v354, 4
        %v396 = vsel %vm379, %v395, %v394
        %v397 = vrot.slane %v355, 3
        %v398 = vsel %vm382, %v397, %v396
        %v399 = vrot.slane %v356, 2
        %v400 = vsel %vm385, %v399, %v398
        %v401 = vrot.slane %v349, 2
        %v402 = vrot.slane %v350, 1
        %v403 = vsel %vm367, %v402, %v401
        %v404 = vsel %vm370, %v351, %v403
        %v405 = vrot.slane %v352, 7
        %v406 = vsel %vm373, %v405, %v404
        %v407 = vrot.slane %v353, 6
        %v408 = vsel %vm376, %v407, %v406
        %v409 = vrot.slane %v354, 5
        %v410 = vsel %vm379, %v409, %v408
        %v411 = vrot.slane %v355, 4
        %v412 = vsel %vm382, %v411, %v410
        %v413 = vrot.slane %v356, 3
        %v414 = vsel %vm385, %v413, %v412
        %v415 = vrot.slane %v349, 3
        %v416 = vrot.slane %v350, 2
        %v417 = vsel %vm367, %v416, %v415
        %v418 = vrot.slane %v351, 1
        %v419 = vsel %vm370, %v418, %v417
        %v420 = vsel %vm373, %v352, %v419
        %v421 = vrot.slane %v353, 7
        %v422 = vsel %vm376, %v421, %v420
        %v423 = vrot.slane %v354, 6
        %v424 = vsel %vm379, %v423, %v422
        %v425 = vrot.slane %v355, 5
        %v426 = vsel %vm382, %v425, %v424
        %v427 = vrot.slane %v356, 4
        %v428 = vsel %vm385, %v427, %v426
        %v429 = vld [vmem:[%s281] sm:$0xff]
        %v430 = vrot.slane %v358, 7
        %v431 = vsel %vm367, %v430, %v357
        %v432 = vrot.slane %v359, 6
        %v433 = vsel %vm370, %v432, %v431
        %v434 = vrot.slane %v360, 5
        %v435 = vsel %vm373, %v434, %v433
        %v436 = vrot.slane %v361, 4
        %v437 = vsel %vm376, %v436, %v435
        %v438 = vrot.slane %v362, 3
        %v439 = vsel %vm379, %v438, %v437
        %v440 = vrot.slane %v363, 2
        %v441 = vsel %vm382, %v440, %v439
        %v442 = vrot.slane %v364, 1
        %v443 = vsel %vm385, %v442, %v441
        %v444 = vrot.slane %v357, 1
        %v445 = vsel %vm367, %v358, %v444
        %v446 = vrot.slane %v359, 7
        %v447 = vsel %vm370, %v446, %v445
        %v448 = vrot.slane %v360, 6
        %v449 = vsel %vm373, %v448, %v447
        %v450 = vrot.slane %v361, 5
        %v451 = vsel %vm376, %v450, %v449
        %v452 = vrot.slane %v362, 4
        %v453 = vsel %vm379, %v452, %v451
        %v454 = vrot.slane %v363, 3
        %v455 = vsel %vm382, %v454, %v453
        %v456 = vrot.slane %v364, 2
        %v457 = vsel %vm385, %v456, %v455
        %v458 = vrot.slane %v357, 2
        %v459 = vrot.slane %v358, 1
        %v460 = vsel %vm367, %v459, %v458
        %v461 = vsel %vm370, %v359, %v460
        %v462 = vrot.slane %v360, 7
        %v463 = vsel %vm373, %v462, %v461
        %v464 = vrot.slane %v361, 6
        %v465 = vsel %vm376, %v464, %v463
        %v466 = vrot.slane %v362, 5
        %v467 = vsel %vm379, %v466, %v465
        %v468 = vrot.slane %v363, 4
        %v469 = vsel %vm382, %v468, %v467
        %v470 = vrot.slane %v364, 3
        %v471 = vsel %vm385, %v470, %v469
        %v472 = vrot.slane %v357, 3
        %v473 = vrot.slane %v358, 2
        %v474 = vsel %vm367, %v473, %v472
        %v475 = vrot.slane %v359, 1
        %v476 = vsel %vm370, %v475, %v474
        %v477 = vsel %vm373, %v360, %v476
        %v478 = vrot.slane %v361, 7
        %v479 = vsel %vm376, %v478, %v477
        %v480 = vrot.slane %v362, 6
        %v481 = vsel %vm379, %v480, %v479
        %v482 = vrot.slane %v363, 5
        %v483 = vsel %vm382, %v482, %v481
        %v484 = vrot.slane %v364, 4
        %v485 = vsel %vm385, %v484, %v483
        %v486 = vcvt.s32.f32 %v429
        %v487 = vcvt.s32.f32 %v443
        %v488 = vcvt.s32.f32 %v457
        %v489 = vcvt.s32.f32 %v471
        %v490 = vcvt.s32.f32 %v485
        %v491 = vlaneseq
        %v492 = vand.u32 %v491, 127
        %493 = vset.pattern.permute.xlu0 0
        %494 = vperm.xlu0 %493, %v365
        %v495 = vpop.permute.xlu0 %494
        %496 = vset.pattern.permute.xlu0 0
        %497 = vperm.xlu0 %496, %v386
        %v498 = vpop.permute.xlu0 %497
        %499 = vset.pattern.permute.xlu0 0
        %500 = vperm.xlu0 %499, %v400
        %v501 = vpop.permute.xlu0 %500
        %502 = vset.pattern.permute.xlu0 0
        %503 = vperm.xlu0 %502, %v414
        %v504 = vpop.permute.xlu0 %503
        %505 = vset.pattern.permute.xlu0 0
        %506 = vperm.xlu0 %505, %v428
        %v507 = vpop.permute.xlu0 %506
        %vm508 = vcmp.eq.s32.totalorder %v492, %v495
        %vm509 = vcmp.eq.s32.totalorder %v492, %v498
        %vm510 = vcmp.eq.s32.totalorder %v492, %v501
        %vm511 = vcmp.eq.s32.totalorder %v492, %v504
        %vm512 = vcmp.eq.s32.totalorder %v492, %v507
        %514 = vset.pattern.permute.xlu0 0
        %515 = vperm.xlu0 %514, %v486
        %v516 = vpop.permute.xlu0 %515
        %519 = vset.pattern.permute.xlu0 0
        %520 = vperm.xlu0 %519, %v487
        %v521 = vpop.permute.xlu0 %520
        %524 = vset.pattern.permute.xlu0 0
        %525 = vperm.xlu0 %524, %v488
        %v526 = vpop.permute.xlu0 %525
        %529 = vset.pattern.permute.xlu0 0
        %530 = vperm.xlu0 %529, %v489
        %v531 = vpop.permute.xlu0 %530
        %534 = vset.pattern.permute.xlu0 0
        %535 = vperm.xlu0 %534, %v490
        %v536 = vpop.permute.xlu0 %535
        %v538 = vsel %vm508, %v516, 0.0
        %v539 = vsel %vm509, %v521, 0.0
        %v540 = vsel %vm510, %v526, 0.0
        %v541 = vsel %vm511, %v531, 0.0
        %v542 = vsel %vm512, %v536, 0.0
        %v543 = vadd.f32 %v538, 0.0
        %v544 = vadd.f32 %v539, 0.0
        %v545 = vadd.f32 %v540, 0.0
        %v546 = vadd.f32 %v541, 0.0
        %v547 = vadd.f32 %v542, 0.0
        %548 = vset.pattern.permute.xlu0 1
        %549 = vperm.xlu0 %548, %v365
        %v550 = vpop.permute.xlu0 %549
        %551 = vset.pattern.permute.xlu0 1
        %552 = vperm.xlu0 %551, %v386
        %v553 = vpop.permute.xlu0 %552
        %554 = vset.pattern.permute.xlu0 1
        %555 = vperm.xlu0 %554, %v400
        %v556 = vpop.permute.xlu0 %555
        %557 = vset.pattern.permute.xlu0 1
        %558 = vperm.xlu0 %557, %v414
        %v559 = vpop.permute.xlu0 %558
        %560 = vset.pattern.permute.xlu0 1
        %561 = vperm.xlu0 %560, %v428
        %v562 = vpop.permute.xlu0 %561
        %vm563 = vcmp.eq.s32.totalorder %v492, %v550
        %vm564 = vcmp.eq.s32.totalorder %v492, %v553
        %vm565 = vcmp.eq.s32.totalorder %v492, %v556
        %vm566 = vcmp.eq.s32.totalorder %v492, %v559
        %vm567 = vcmp.eq.s32.totalorder %v492, %v562
        %568 = vset.pattern.permute.xlu0 1
        %569 = vperm.xlu0 %568, %v486
        %v570 = vpop.permute.xlu0 %569
        %572 = vset.pattern.permute.xlu0 1
        %573 = vperm.xlu0 %572, %v487
        %v574 = vpop.permute.xlu0 %573
        %576 = vset.pattern.permute.xlu0 1
        %577 = vperm.xlu0 %576, %v488
        %v578 = vpop.permute.xlu0 %577
        %580 = vset.pattern.permute.xlu0 1
        %581 = vperm.xlu0 %580, %v489
        %v582 = vpop.permute.xlu0 %581
        %584 = vset.pattern.permute.xlu0 1
        %585 = vperm.xlu0 %584, %v490
        %v586 = vpop.permute.xlu0 %585
        %v588 = vsel %vm563, %v570, 0.0
        %v589 = vsel %vm564, %v574, 0.0
        %v590 = vsel %vm565, %v578, 0.0
        %v591 = vsel %vm566, %v582, 0.0
        %v592 = vsel %vm567, %v586, 0.0
        %v593 = vadd.f32 %v543, %v588
        %v594 = vadd.f32 %v544, %v589
        %v595 = vadd.f32 %v545, %v590
        %v596 = vadd.f32 %v546, %v591
        %v597 = vadd.f32 %v547, %v592
        %598 = vset.pattern.permute.xlu0 2
        %599 = vperm.xlu0 %598, %v365
        %v600 = vpop.permute.xlu0 %599
        %601 = vset.pattern.permute.xlu0 2
        %602 = vperm.xlu0 %601, %v386
        %v603 = vpop.permute.xlu0 %602
        %604 = vset.pattern.permute.xlu0 2
        %605 = vperm.xlu0 %604, %v400
        %v606 = vpop.permute.xlu0 %605
        %607 = vset.pattern.permute.xlu0 2
        %608 = vperm.xlu0 %607, %v414
        %v609 = vpop.permute.xlu0 %608
        %610 = vset.pattern.permute.xlu0 2
        %611 = vperm.xlu0 %610, %v428
        %v612 = vpop.permute.xlu0 %611
        %vm613 = vcmp.eq.s32.totalorder %v492, %v600
        %vm614 = vcmp.eq.s32.totalorder %v492, %v603
        %vm615 = vcmp.eq.s32.totalorder %v492, %v606
        %vm616 = vcmp.eq.s32.totalorder %v492, %v609
        %vm617 = vcmp.eq.s32.totalorder %v492, %v612
        %618 = vset.pattern.permute.xlu0 2
        %619 = vperm.xlu0 %618, %v486
        %v620 = vpop.permute.xlu0 %619
        %622 = vset.pattern.permute.xlu0 2
        %623 = vperm.xlu0 %622, %v487
        %v624 = vpop.permute.xlu0 %623
        %626 = vset.pattern.permute.xlu0 2
        %627 = vperm.xlu0 %626, %v488
        %v628 = vpop.permute.xlu0 %627
        %630 = vset.pattern.permute.xlu0 2
        %631 = vperm.xlu0 %630, %v489
        %v632 = vpop.permute.xlu0 %631
        %634 = vset.pattern.permute.xlu0 2
        %635 = vperm.xlu0 %634, %v490
        %v636 = vpop.permute.xlu0 %635
        %v638 = vsel %vm613, %v620, 0.0
        %v639 = vsel %vm614, %v624, 0.0
        %v640 = vsel %vm615, %v628, 0.0
        %v641 = vsel %vm616, %v632, 0.0
        %v642 = vsel %vm617, %v636, 0.0
        %v643 = vadd.f32 %v593, %v638
        %v644 = vadd.f32 %v594, %v639
        %v645 = vadd.f32 %v595, %v640
        %v646 = vadd.f32 %v596, %v641
        %v647 = vadd.f32 %v597, %v642
        %648 = vset.pattern.permute.xlu0 3
        %649 = vperm.xlu0 %648, %v365
        %v650 = vpop.permute.xlu0 %649
        %651 = vset.pattern.permute.xlu0 3
        %652 = vperm.xlu0 %651, %v386
        %v653 = vpop.permute.xlu0 %652
        %654 = vset.pattern.permute.xlu0 3
        %655 = vperm.xlu0 %654, %v400
        %v656 = vpop.permute.xlu0 %655
        %657 = vset.pattern.permute.xlu0 3
        %658 = vperm.xlu0 %657, %v414
        %v659 = vpop.permute.xlu0 %658
        %660 = vset.pattern.permute.xlu0 3
        %661 = vperm.xlu0 %660, %v428
        %v662 = vpop.permute.xlu0 %661
        %vm663 = vcmp.eq.s32.totalorder %v492, %v650
        %vm664 = vcmp.eq.s32.totalorder %v492, %v653
        %vm665 = vcmp.eq.s32.totalorder %v492, %v656
        %vm666 = vcmp.eq.s32.totalorder %v492, %v659
        %vm667 = vcmp.eq.s32.totalorder %v492, %v662
        %668 = vset.pattern.permute.xlu0 3
        %669 = vperm.xlu0 %668, %v486
        %v670 = vpop.permute.xlu0 %669
        %672 = vset.pattern.permute.xlu0 3
        %673 = vperm.xlu0 %672, %v487
        %v674 = vpop.permute.xlu0 %673
        %676 = vset.pattern.permute.xlu0 3
        %677 = vperm.xlu0 %676, %v488
        %v678 = vpop.permute.xlu0 %677
        %680 = vset.pattern.permute.xlu0 3
        %681 = vperm.xlu0 %680, %v489
        %v682 = vpop.permute.xlu0 %681
        %684 = vset.pattern.permute.xlu0 3
        %685 = vperm.xlu0 %684, %v490
        %v686 = vpop.permute.xlu0 %685
        %v688 = vsel %vm663, %v670, 0.0
        %v689 = vsel %vm664, %v674, 0.0
        %v690 = vsel %vm665, %v678, 0.0
        %v691 = vsel %vm666, %v682, 0.0
        %v692 = vsel %vm667, %v686, 0.0
        %v693 = vadd.f32 %v643, %v688
        %v694 = vadd.f32 %v644, %v689
        %v695 = vadd.f32 %v645, %v690
        %v696 = vadd.f32 %v646, %v691
        %v697 = vadd.f32 %v647, %v692
        %698 = vset.pattern.permute.xlu0 4
        %699 = vperm.xlu0 %698, %v365
        %v700 = vpop.permute.xlu0 %699
        %701 = vset.pattern.permute.xlu0 4
        %702 = vperm.xlu0 %701, %v386
        %v703 = vpop.permute.xlu0 %702
        %704 = vset.pattern.permute.xlu0 4
        %705 = vperm.xlu0 %704, %v400
        %v706 = vpop.permute.xlu0 %705
        %707 = vset.pattern.permute.xlu0 4
        %708 = vperm.xlu0 %707, %v414
        %v709 = vpop.permute.xlu0 %708
        %710 = vset.pattern.permute.xlu0 4
        %711 = vperm.xlu0 %710, %v428
        %v712 = vpop.permute.xlu0 %711
        %vm713 = vcmp.eq.s32.totalorder %v492, %v700
        %vm714 = vcmp.eq.s32.totalorder %v492, %v703
        %vm715 = vcmp.eq.s32.totalorder %v492, %v706
        %vm716 = vcmp.eq.s32.totalorder %v492, %v709
        %vm717 = vcmp.eq.s32.totalorder %v492, %v712
        %718 = vset.pattern.permute.xlu0 4
        %719 = vperm.xlu0 %718, %v486
        %v720 = vpop.permute.xlu0 %719
        %722 = vset.pattern.permute.xlu0 4
        %723 = vperm.xlu0 %722, %v487
        %v724 = vpop.permute.xlu0 %723
        %726 = vset.pattern.permute.xlu0 4
        %727 = vperm.xlu0 %726, %v488
        %v728 = vpop.permute.xlu0 %727
        %730 = vset.pattern.permute.xlu0 4
        %731 = vperm.xlu0 %730, %v489
        %v732 = vpop.permute.xlu0 %731
        %734 = vset.pattern.permute.xlu0 4
        %735 = vperm.xlu0 %734, %v490
        %v736 = vpop.permute.xlu0 %735
        %v738 = vsel %vm713, %v720, 0.0
        %v739 = vsel %vm714, %v724, 0.0
        %v740 = vsel %vm715, %v728, 0.0
        %v741 = vsel %vm716, %v732, 0.0
        %v742 = vsel %vm717, %v736, 0.0
        %v743 = vadd.f32 %v693, %v738
        %v744 = vadd.f32 %v694, %v739
        %v745 = vadd.f32 %v695, %v740
        %v746 = vadd.f32 %v696, %v741
        %v747 = vadd.f32 %v697, %v742
        %748 = vset.pattern.permute.xlu0 5
        %749 = vperm.xlu0 %748, %v365
        %v750 = vpop.permute.xlu0 %749
        %751 = vset.pattern.permute.xlu0 5
        %752 = vperm.xlu0 %751, %v386
        %v753 = vpop.permute.xlu0 %752
        %754 = vset.pattern.permute.xlu0 5
        %755 = vperm.xlu0 %754, %v400
        %v756 = vpop.permute.xlu0 %755
        %757 = vset.pattern.permute.xlu0 5
        %758 = vperm.xlu0 %757, %v414
        %v759 = vpop.permute.xlu0 %758
        %760 = vset.pattern.permute.xlu0 5
        %761 = vperm.xlu0 %760, %v428
        %v762 = vpop.permute.xlu0 %761
        %vm763 = vcmp.eq.s32.totalorder %v492, %v750
        %vm764 = vcmp.eq.s32.totalorder %v492, %v753
        %vm765 = vcmp.eq.s32.totalorder %v492, %v756
        %vm766 = vcmp.eq.s32.totalorder %v492, %v759
        %vm767 = vcmp.eq.s32.totalorder %v492, %v762
        %768 = vset.pattern.permute.xlu0 5
        %769 = vperm.xlu0 %768, %v486
        %v770 = vpop.permute.xlu0 %769
        %772 = vset.pattern.permute.xlu0 5
        %773 = vperm.xlu0 %772, %v487
        %v774 = vpop.permute.xlu0 %773
        %776 = vset.pattern.permute.xlu0 5
        %777 = vperm.xlu0 %776, %v488
        %v778 = vpop.permute.xlu0 %777
        %780 = vset.pattern.permute.xlu0 5
        %781 = vperm.xlu0 %780, %v489
        %v782 = vpop.permute.xlu0 %781
        %784 = vset.pattern.permute.xlu0 5
        %785 = vperm.xlu0 %784, %v490
        %v786 = vpop.permute.xlu0 %785
        %v788 = vsel %vm763, %v770, 0.0
        %v789 = vsel %vm764, %v774, 0.0
        %v790 = vsel %vm765, %v778, 0.0
        %v791 = vsel %vm766, %v782, 0.0
        %v792 = vsel %vm767, %v786, 0.0
        %v793 = vadd.f32 %v743, %v788
        %v794 = vadd.f32 %v744, %v789
        %v795 = vadd.f32 %v745, %v790
        %v796 = vadd.f32 %v746, %v791
        %v797 = vadd.f32 %v747, %v792
        %798 = vset.pattern.permute.xlu0 6
        %799 = vperm.xlu0 %798, %v365
        %v800 = vpop.permute.xlu0 %799
        %801 = vset.pattern.permute.xlu0 6
        %802 = vperm.xlu0 %801, %v386
        %v803 = vpop.permute.xlu0 %802
        %804 = vset.pattern.permute.xlu0 6
        %805 = vperm.xlu0 %804, %v400
        %v806 = vpop.permute.xlu0 %805
        %807 = vset.pattern.permute.xlu0 6
        %808 = vperm.xlu0 %807, %v414
        %v809 = vpop.permute.xlu0 %808
        %810 = vset.pattern.permute.xlu0 6
        %811 = vperm.xlu0 %810, %v428
        %v812 = vpop.permute.xlu0 %811
        %vm813 = vcmp.eq.s32.totalorder %v492, %v800
        %vm814 = vcmp.eq.s32.totalorder %v492, %v803
        %vm815 = vcmp.eq.s32.totalorder %v492, %v806
        %vm816 = vcmp.eq.s32.totalorder %v492, %v809
        %vm817 = vcmp.eq.s32.totalorder %v492, %v812
        %818 = vset.pattern.permute.xlu0 6
        %819 = vperm.xlu0 %818, %v486
        %v820 = vpop.permute.xlu0 %819
        %822 = vset.pattern.permute.xlu0 6
        %823 = vperm.xlu0 %822, %v487
        %v824 = vpop.permute.xlu0 %823
        %826 = vset.pattern.permute.xlu0 6
        %827 = vperm.xlu0 %826, %v488
        %v828 = vpop.permute.xlu0 %827
        %830 = vset.pattern.permute.xlu0 6
        %831 = vperm.xlu0 %830, %v489
        %v832 = vpop.permute.xlu0 %831
        %834 = vset.pattern.permute.xlu0 6
        %835 = vperm.xlu0 %834, %v490
        %v836 = vpop.permute.xlu0 %835
        %v838 = vsel %vm813, %v820, 0.0
        %v839 = vsel %vm814, %v824, 0.0
        %v840 = vsel %vm815, %v828, 0.0
        %v841 = vsel %vm816, %v832, 0.0
        %v842 = vsel %vm817, %v836, 0.0
        %v843 = vadd.f32 %v793, %v838
        %v844 = vadd.f32 %v794, %v839
        %v845 = vadd.f32 %v795, %v840
        %v846 = vadd.f32 %v796, %v841
        %v847 = vadd.f32 %v797, %v842
        %848 = vset.pattern.permute.xlu0 7
        %849 = vperm.xlu0 %848, %v365
        %v850 = vpop.permute.xlu0 %849
        %851 = vset.pattern.permute.xlu0 7
        %852 = vperm.xlu0 %851, %v386
        %v853 = vpop.permute.xlu0 %852
        %854 = vset.pattern.permute.xlu0 7
        %855 = vperm.xlu0 %854, %v400
        %v856 = vpop.permute.xlu0 %855
        %857 = vset.pattern.permute.xlu0 7
        %858 = vperm.xlu0 %857, %v414
        %v859 = vpop.permute.xlu0 %858
        %860 = vset.pattern.permute.xlu0 7
        %861 = vperm.xlu0 %860, %v428
        %v862 = vpop.permute.xlu0 %861
        %vm863 = vcmp.eq.s32.totalorder %v492, %v850
        %vm864 = vcmp.eq.s32.totalorder %v492, %v853
        %vm865 = vcmp.eq.s32.totalorder %v492, %v856
        %vm866 = vcmp.eq.s32.totalorder %v492, %v859
        %vm867 = vcmp.eq.s32.totalorder %v492, %v862
        %868 = vset.pattern.permute.xlu0 7
        %869 = vperm.xlu0 %868, %v486
        %v870 = vpop.permute.xlu0 %869
        %872 = vset.pattern.permute.xlu0 7
        %873 = vperm.xlu0 %872, %v487
        %v874 = vpop.permute.xlu0 %873
        %876 = vset.pattern.permute.xlu0 7
        %877 = vperm.xlu0 %876, %v488
        %v878 = vpop.permute.xlu0 %877
        %880 = vset.pattern.permute.xlu0 7
        %881 = vperm.xlu0 %880, %v489
        %v882 = vpop.permute.xlu0 %881
        %884 = vset.pattern.permute.xlu0 7
        %885 = vperm.xlu0 %884, %v490
        %v886 = vpop.permute.xlu0 %885
        %v888 = vsel %vm863, %v870, 0.0
        %v889 = vsel %vm864, %v874, 0.0
        %v890 = vsel %vm865, %v878, 0.0
        %v891 = vsel %vm866, %v882, 0.0
        %v892 = vsel %vm867, %v886, 0.0
        %v893 = vadd.f32 %v843, %v888
        %v894 = vadd.f32 %v844, %v889
        %v895 = vadd.f32 %v845, %v890
        %v896 = vadd.f32 %v846, %v891
        %v897 = vadd.f32 %v847, %v892
        %vm898 = vcmask 64512
        %v899 = vsel %vm898, %v486, 0.0
        %900 = vadd.xlane.f32.xlu0 %v899
        %v901 = vpop.xlane.xlu0 %900
        %v902 = vsel %vm898, %v487, 0.0
        %903 = vadd.xlane.f32.xlu0 %v902
        %v904 = vpop.xlane.xlu0 %903
        %v905 = vsel %vm898, %v488, 0.0
        %906 = vadd.xlane.f32.xlu0 %v905
        %v907 = vpop.xlane.xlu0 %906
        %v908 = vsel %vm898, %v489, 0.0
        %909 = vadd.xlane.f32.xlu0 %v908
        %v910 = vpop.xlane.xlu0 %909
        %v911 = vsel %vm898, %v490, 0.0
        %912 = vadd.xlane.f32.xlu0 %v911
        %v913 = vpop.xlane.xlu0 %912
        %v914 = vpack.c.bf16 %v894, %v893
        %v915 = vpack.c.bf16 %v896, %v895
        %v916 = vpack.c.bf16 %v897, %v897
        %917 = vmatpush.bf16.msra.mxu0 %v321
        %918 = vmatpush.bf16.msra.mxu0 %v320
        %919 = vmatpush.bf16.msra.mxu0 %v319
        %920 = vmatpush.bf16.msra.mxu0 %v318
        %921 = vmatpush.bf16.msra.mxu0 %v317
        %922 = vmatpush.bf16.msra.mxu0 %v316
        %923 = vmatpush.bf16.msra.mxu0 %v315
        %924 = vmatpush.bf16.msra.mxu0 %v314
        %925 = vmatmul.bf16.gmra.mxu0 %v914
        %v926 = vpop.f32.mrf.mxu0
        %v927 = vadd.f32 0.0, %v926
        %v928 = vpop.f32.mrf.mxu0
        %v929 = vadd.f32 0.0, %v928
        %930 = vmatmul.bf16.gmra.mxu0 %v915
        %v931 = vpop.f32.mrf.mxu0
        %v932 = vadd.f32 0.0, %v931
        %v933 = vpop.f32.mrf.mxu0
        %v934 = vadd.f32 0.0, %v933
        %935 = vmatmul.bf16.gmra.mxu0 %v916
        %v936 = vpop.f32.mrf.mxu0
        %v937 = vadd.f32 0.0, %v936
        %v938 = vpop.f32.mrf.mxu0
        %939 = vdwg.mxu0
        %v940 = vmax.f32 %v901, 1.0
        %v941 = vmax.f32 %v904, 1.0
        %v942 = vmax.f32 %v907, 1.0
        %v943 = vmax.f32 %v910, 1.0
        %v944 = vmax.f32 %v913, 1.0
        %v945 = vrcp.pop %v940
        %v946 = vrcp.pop %v941
        %v947 = vrcp.pop %v942
        %v948 = vrcp.pop %v943
        %v949 = vrcp.pop %v944
        %v950 = vmul.f32 %v927, %v945
        %v951 = vmul.f32 %v929, %v946
        %v952 = vmul.f32 %v932, %v947
        %v953 = vmul.f32 %v934, %v948
        %v954 = vmul.f32 %v937, %v949
        %v955 = vperm.slane %v348, 0
        %vm956 = vcmask 261120
        %v958 = vsel %vm956, %v950, 0
        %v961 = vsel %vm956, %v951, 0
        %v964 = vsel %vm956, %v952, 0
        %v967 = vsel %vm956, %v953, 0
        %v970 = vsel %vm956, %v954, 0
        %972 = vmatpush.msra.mxu0 0.0
        %973 = vmatpush.msra.mxu0 0.0
        %974 = vmatpush.msra.mxu0 0.0
        %975 = vmatpush.msra.mxu0 0.0
        %976 = vmatpush.msra.mxu0 0.0
        %977 = vmatpush.msra.mxu0 0.0
        %978 = vmatpush.msra.mxu0 0.0
        %979 = vmatpush.msra.mxu0 0.0
        %980 = vmatpush.msra.mxu0 0.0
        %981 = vmatpush.msra.mxu0 0.0
        %982 = vmatpush.msra.mxu0 0.0
        %983 = vmatpush.msra.mxu0 0.0
        %984 = vmatpush.msra.mxu0 %v325
        %985 = vmatpush.msra.mxu0 %v324
        %986 = vmatpush.msra.mxu0 %v323
        %987 = vmatpush.msra.mxu0 %v322
        %988 = vmatmul.f32.gmra.mxu0 %v958
        %v989 = vpop.f32.mrf.mxu0
        %v990 = vadd.f32 %v955, %v989
        %991 = vmatmul.f32.gmra.mxu0 %v961
        %v992 = vpop.f32.mrf.mxu0
        %v993 = vadd.f32 %v955, %v992
        %994 = vmatmul.f32.gmra.mxu0 %v964
        %v995 = vpop.f32.mrf.mxu0
        %v996 = vadd.f32 %v955, %v995
        %997 = vmatmul.f32.gmra.mxu0 %v967
        %v998 = vpop.f32.mrf.mxu0
        %v999 = vadd.f32 %v955, %v998
        %1000 = vmatmul.f32.gmra.mxu0 %v970
        %v1001 = vpop.f32.mrf.mxu0
        %v1002 = vadd.f32 %v955, %v1001
        %1003 = vdwg.mxu0
        %v1004 = vtanh.pop %v990
        %v1005 = vtanh.pop %v993
        %v1006 = vtanh.pop %v996
        %v1007 = vtanh.pop %v999
        %v1008 = vtanh.pop %v1002
        %v1009 = vperm.slane %v348, 1
        %v1011 = vsel %vm956, %v1004, 0
        %1013 = vmatpush.msra.mxu0 0.0
        %1014 = vmatpush.msra.mxu0 0.0
        %1015 = vmatpush.msra.mxu0 0.0
        %1016 = vmatpush.msra.mxu0 0.0
        %1017 = vmatpush.msra.mxu0 0.0
        %1018 = vmatpush.msra.mxu0 0.0
        %1019 = vmatpush.msra.mxu0 0.0
        %1020 = vmatpush.msra.mxu0 0.0
        %1021 = vmatpush.msra.mxu0 0.0
        %1022 = vmatpush.msra.mxu0 0.0
        %1023 = vmatpush.msra.mxu0 0.0
        %1024 = vmatpush.msra.mxu0 0.0
        %1025 = vmatpush.msra.mxu0 %v329
        %1026 = vmatpush.msra.mxu0 %v328
        %1027 = vmatpush.msra.mxu0 %v327
        %1028 = vmatpush.msra.mxu0 %v326
        %1029 = vmatmul.f32.gmra.mxu0 %v1011
        %v1030 = vpop.f32.mrf.mxu0
        %v1031 = vadd.f32 %v1009, %v1030
        %1032 = vdwg.mxu0
        %v1034 = vsel %vm956, %v1005, 0
        %v1037 = vsel %vm956, %v1006, 0
        %v1040 = vsel %vm956, %v1007, 0
        %v1043 = vsel %vm956, %v1008, 0
        %1045 = vmatpush.msra.mxu0 0.0
        %1046 = vmatpush.msra.mxu0 0.0
        %1047 = vmatpush.msra.mxu0 0.0
        %1048 = vmatpush.msra.mxu0 0.0
        %1049 = vmatpush.msra.mxu0 0.0
        %1050 = vmatpush.msra.mxu0 0.0
        %1051 = vmatpush.msra.mxu0 0.0
        %1052 = vmatpush.msra.mxu0 0.0
        %1053 = vmatpush.msra.mxu0 0.0
        %1054 = vmatpush.msra.mxu0 0.0
        %1055 = vmatpush.msra.mxu0 0.0
        %1056 = vmatpush.msra.mxu0 0.0
        %1057 = vmatpush.msra.mxu0 %v333
        %1058 = vmatpush.msra.mxu0 %v332
        %1059 = vmatpush.msra.mxu0 %v331
        %1060 = vmatpush.msra.mxu0 %v330
        %1061 = vmatmul.f32.gmra.mxu0 %v1034
        %v1062 = vpop.f32.mrf.mxu0
        %v1063 = vadd.f32 0.0, %v1062
        %1064 = vmatmul.f32.gmra.mxu0 %v1037
        %v1065 = vpop.f32.mrf.mxu0
        %v1066 = vadd.f32 0.0, %v1065
        %1067 = vmatmul.f32.gmra.mxu0 %v1040
        %v1068 = vpop.f32.mrf.mxu0
        %v1069 = vadd.f32 0.0, %v1068
        %1070 = vmatmul.f32.gmra.mxu0 %v1043
        %v1071 = vpop.f32.mrf.mxu0
        %v1072 = vadd.f32 0.0, %v1071
        %1073 = vdwg.mxu0
        %1074 = vmatpush.msra.mxu0 0.0
        %1075 = vmatpush.msra.mxu0 0.0
        %1076 = vmatpush.msra.mxu0 0.0
        %1077 = vmatpush.msra.mxu0 0.0
        %1078 = vmatpush.msra.mxu0 0.0
        %1079 = vmatpush.msra.mxu0 0.0
        %1080 = vmatpush.msra.mxu0 0.0
        %1081 = vmatpush.msra.mxu0 0.0
        %1082 = vmatpush.msra.mxu0 0.0
        %1083 = vmatpush.msra.mxu0 0.0
        %1084 = vmatpush.msra.mxu0 0.0
        %1085 = vmatpush.msra.mxu0 0.0
        %1086 = vmatpush.msra.mxu0 %v337
        %1087 = vmatpush.msra.mxu0 %v336
        %1088 = vmatpush.msra.mxu0 %v335
        %1089 = vmatpush.msra.mxu0 %v334
        %1090 = vmatmul.f32.gmra.mxu0 %v1034
        %v1091 = vpop.f32.mrf.mxu0
        %1092 = vmatmul.f32.gmra.mxu0 %v1037
        %v1093 = vpop.f32.mrf.mxu0
        %v1094 = vadd.f32 0.0, %v1093
        %1095 = vmatmul.f32.gmra.mxu0 %v1040
        %v1096 = vpop.f32.mrf.mxu0
        %v1097 = vadd.f32 0.0, %v1096
        %1098 = vmatmul.f32.gmra.mxu0 %v1043
        %v1099 = vpop.f32.mrf.mxu0
        %v1100 = vadd.f32 0.0, %v1099
        %1101 = vdwg.mxu0
        %1102 = vmatpush.msra.mxu0 0.0
        %1103 = vmatpush.msra.mxu0 0.0
        %1104 = vmatpush.msra.mxu0 0.0
        %1105 = vmatpush.msra.mxu0 0.0
        %1106 = vmatpush.msra.mxu0 0.0
        %1107 = vmatpush.msra.mxu0 0.0
        %1108 = vmatpush.msra.mxu0 0.0
        %1109 = vmatpush.msra.mxu0 0.0
        %1110 = vmatpush.msra.mxu0 0.0
        %1111 = vmatpush.msra.mxu0 0.0
        %1112 = vmatpush.msra.mxu0 0.0
        %1113 = vmatpush.msra.mxu0 0.0
        %1114 = vmatpush.msra.mxu0 %v341
        %1115 = vmatpush.msra.mxu0 %v340
        %1116 = vmatpush.msra.mxu0 %v339
        %1117 = vmatpush.msra.mxu0 %v338
        %1118 = vmatmul.f32.gmra.mxu0 %v1034
        %v1119 = vpop.f32.mrf.mxu0
        %1120 = vmatmul.f32.gmra.mxu0 %v1037
        %v1121 = vpop.f32.mrf.mxu0
        %1122 = vmatmul.f32.gmra.mxu0 %v1040
        %v1123 = vpop.f32.mrf.mxu0
        %v1124 = vadd.f32 0.0, %v1123
        %1125 = vmatmul.f32.gmra.mxu0 %v1043
        %v1126 = vpop.f32.mrf.mxu0
        %v1127 = vadd.f32 0.0, %v1126
        %1128 = vdwg.mxu0
        %v1129 = vadd.f32 %v1063, %v1094
        %v1130 = vadd.f32 %v1129, %v1124
        %v1131 = vadd.f32 %v1066, %v1097
        %v1132 = vadd.f32 %v1131, %v1127
        %v1133 = vmax.f32 %v1130, %v1132
        %v1134 = vadd.f32 %v1069, %v1100
        %vm1135 = vcmp.lt.s32.totalorder %v492, 16
        %v1136 = vsel %vm1135, %v1134, -1e+30
        %v1137 = vmax.f32 %v1133, %v1136
        %vm1138 = vcmp.lt.s32.totalorder %v492, 8
        %v1139 = vsel %vm1138, %v1072, -1e+30
        %v1140 = vmax.f32 %v1137, %v1139
        %v1141 = vperm.slane %v348, 2
        %v1142 = vadd.f32 %v1140, %v1141
        %v1143 = vmax.f32 %v1142, 0.0
        %vm1144 = vcmask 195584
        %v1146 = vsel %vm1144, %v1143, 0
        %1148 = vmatpush.msra.mxu0 0.0
        %1149 = vmatpush.msra.mxu0 0.0
        %1150 = vmatpush.msra.mxu0 0.0
        %1151 = vmatpush.msra.mxu0 0.0
        %1152 = vmatpush.msra.mxu0 0.0
        %1153 = vmatpush.msra.mxu0 0.0
        %1154 = vmatpush.msra.mxu0 0.0
        %1155 = vmatpush.msra.mxu0 0.0
        %1156 = vmatpush.msra.mxu0 0.0
        %1157 = vmatpush.msra.mxu0 0.0
        %1158 = vmatpush.msra.mxu0 0.0
        %1159 = vmatpush.msra.mxu0 0.0
        %1160 = vmatpush.msra.mxu0 0.0
        %1161 = vmatpush.msra.mxu0 %v347
        %1162 = vmatpush.msra.mxu0 %v346
        %1163 = vmatpush.msra.mxu0 %v345
        %1164 = vmatmul.f32.gmra.mxu0 %v1146
        %v1165 = vpop.f32.mrf.mxu0
        %v1166 = vadd.f32 0.0, %v1165
        %1167 = vdwg.mxu0
        %v1169 = vsel %vm1144, %v1031, 0
        %1171 = vmatpush.msra.mxu0 0.0
        %1172 = vmatpush.msra.mxu0 0.0
        %1173 = vmatpush.msra.mxu0 0.0
        %1174 = vmatpush.msra.mxu0 0.0
        %1175 = vmatpush.msra.mxu0 0.0
        %1176 = vmatpush.msra.mxu0 0.0
        %1177 = vmatpush.msra.mxu0 0.0
        %1178 = vmatpush.msra.mxu0 0.0
        %1179 = vmatpush.msra.mxu0 0.0
        %1180 = vmatpush.msra.mxu0 0.0
        %1181 = vmatpush.msra.mxu0 0.0
        %1182 = vmatpush.msra.mxu0 0.0
        %1183 = vmatpush.msra.mxu0 0.0
        %1184 = vmatpush.msra.mxu0 %v344
        %1185 = vmatpush.msra.mxu0 %v343
        %1186 = vmatpush.msra.mxu0 %v342
        %1187 = vmatmul.f32.gmra.mxu0 %v1169
        %v1188 = vpop.f32.mrf.mxu0
        %v1189 = vadd.f32 %v1166, %v1188
        %1190 = vdwg.mxu0
        %v1191 = vperm.slane %v348, 3
        %v1192 = vadd.f32 %v1189, %v1191
        %v1193 = vmax.f32 %v1192, 0.0
        %v1194 = vperm.slane %v348, 5
        %v1195 = vmul.f32 %v1193, %v1194
        %vm1196 = vcmask 130048
        %v1197 = vsel %vm1196, %v1195, 0.0
        %1198 = vadd.xlane.f32.xlu0 %v1197
        %v1199 = vpop.xlane.xlu0 %1198
        %v1200 = vperm.slane %v348, 4
        %v1201 = vadd.f32 %v1199, %v1200
        %v1202 = vxor.u32 %v1201, 2147483648
        %v1203 = vmul.f32 %v1202, 1.442695
        %v1204 = vpow.pop %v1203
        %v1205 = vadd.f32 %v1204, 1.0
        %v1206 = vrcp.pop %v1205
        %v1207 = vmul.f32 %v1205, %v1206
        %v1208 = vsub.f32 1.0, %v1207
        %v1209 = vmul.f32 %v1206, %v1208
        %v1210 = vadd.f32 %v1206, %v1209
        %vm1211 = vweird.f32 %v1205
        %vm1212 = vweird.f32 %v1206
        %vm1213 = vmor %vm1211, %vm1212
        %v1214 = vsel %vm1213, %v1206, %v1210
        %v1215 = vand.u32 2147483647, %v1205
        %vm1216 = vcmp.eq.f32.partialorder %v1215, 8.507059e+37
        %v1217 = vand.u32 %v1205, 2147483648
        %v1218 = vor.u32 1.1754944e-38, %v1217
        %v1219 = vsel %vm1216, %v1218, %v1214
        %v1220 = vmul.f32 1.0, %v1219
        %1222 = vset.pattern.permute.xlu0 0
        %1223 = vperm.xlu0 %1222, %v1220
        %v1224 = vpop.permute.xlu0 %1223
        %1226 = vst [vmem:[%s297] sm:$0xff] %v1224
        %p1227 = scmp.lt.s32.totalorder %s17, 1
        %s1228 = scalar_select %p1227, %s17, 1
        %s1229 = smul.addr %s1228, 8
        %s1230 = scalar_lea.vmem %s5, %s1229
        // Predicated region
        $region45: #{codebert4jit_forward.1} parent=39 // pred_check
          %p1231 = pneg %p160
        $region46: #{codebert4jit_forward.1} parent=39 // pred_check_branch
          %1233 = sbr.rel (%p1231) target = $region48
        $region47: #{codebert4jit_forward.1} parent=39 // pred_region
          _
        $region48: #{codebert4jit_forward.1} parent=39 // pred_fallthru
          _
      $region40: #{codebert4jit_forward.1} parent=5 // pred_fallthru
        _
      %p1234 = scmp.le.s32.totalorder 2, %s12
      // Predicated region
      $region49: #{codebert4jit_forward.1} parent=5 // pred_check
        %p1235 = pneg %p1234
      $region50: #{codebert4jit_forward.1} parent=5 // pred_check_branch
        %1237 = sbr.rel (%p1235) target = $region52
      $region51: #{codebert4jit_forward.1} parent=5 // pred_region
        %s1238 = ssub.s32 %s12, 2
        // Predicated region
        $region53: #{codebert4jit_forward.1} parent=51 // pred_check
          %p1239 = pneg %p166
        $region54: #{codebert4jit_forward.1} parent=51 // pred_check_branch
          %1241 = sbr.rel (%p1239) target = $region56
        $region55: #{codebert4jit_forward.1} parent=51 // pred_region
          %p1242 = scmp.lt.s32.totalorder %s18, 1
          %s1243 = scalar_select %p1242, %s18, 1
          %s1244 = smul.addr %s1243, 8
          %s1245 = scalar_lea.vmem %s5, %s1244
        $region56: #{codebert4jit_forward.1} parent=51 // pred_fallthru
          _
      $region52: #{codebert4jit_forward.1} parent=5 // pred_fallthru
        _
    $region6: #{codebert4jit_forward.1} parent=1 // loop_footer
      %s16 = sadd.s32 1, %s12
    $region7: #{codebert4jit_forward.1} parent=1 // loop_footer_branch
      %11 = sbr.rel target = $region3
    $region8: #{codebert4jit_forward.1} parent=1 // loop_exit
      _
    %1246 = vsyncpa [#allocation3], 1
    %s1247 = scalar_lea.sflag [#allocation3], 1
    %1248 = vsyncpa %s1247, 1

</llo_original>
